<compile_context>
chip_gen: v5e
topology: v5e:2x2
jax: 0.10.0
libtpu: 0.0.40
codegen_flags: <defaults>
</compile_context>

<pallas_src>
import jax
import jax.numpy as jnp
from jax import lax
from jax.experimental import pallas as pl
from jax.experimental.pallas import tpu as pltpu

# OGB bond feature dims (bond_type, bond_stereo, is_conjugated)
FULL_BOND_FEATURE_DIMS = [5, 6, 2]


def _round_up(x, m):
    return ((x + m - 1) // m) * m


def _bond_encoder_kernel(idx_ref, thi_ref, tmid_ref, tlo_ref, out_ref):
    # idx_ref : [rows, pack] int32  combined codes; column j pre-offset by j*pad_v
    # t*_ref  : [K, N]       bf16   block-diagonal combined table split into 3 bf16
    #                               planes (hi/mid/lo); K = pack*pad_v, N = pack*emb
    # out_ref : [rows, N]    f32    lane-dense (>=128 lanes) packed output tile
    idx = idx_ref[...]
    rows, pack = idx.shape
    k = thi_ref.shape[0]

    iota = lax.broadcasted_iota(jnp.int32, (rows, k), 1)
    hot = idx[:, 0:1] == iota
    for j in range(1, pack):  # static & tiny (pack <= 4); lane-blocks are disjoint
        hot = jnp.logical_or(hot, idx[:, j:j + 1] == iota)
    hot = hot.astype(jnp.bfloat16)  # 0/1 exactly representable in bf16

    # Three default-precision bf16 matmuls with f32 accumulation.  The one-hot
    # selects exactly one table row per output element and hi+mid+lo == f32 table
    # exactly, so summing in this order reproduces the f32 gather bit-exactly.
    acc = jnp.dot(hot, thi_ref[...], preferred_element_type=jnp.float32)
    acc = acc + jnp.dot(hot, tmid_ref[...], preferred_element_type=jnp.float32)
    acc = acc + jnp.dot(hot, tlo_ref[...], preferred_element_type=jnp.float32)
    out_ref[...] = acc.astype(out_ref.dtype)


def init_bond_encoder_params(key, emb_dim):
    """Xavier-uniform init of each embedding table (matches torch.nn.init.xavier_uniform_)."""
    tables = []
    for dim in FULL_BOND_FEATURE_DIMS:
        key, sub = jax.random.split(key)
        bound = (6.0 / (dim + emb_dim)) ** 0.5
        tables.append(jax.random.uniform(sub, (dim, emb_dim), jnp.float32,
                                         minval=-bound, maxval=bound))
    return tables


def _block_diag(table, pack):
    if pack == 1:
        return table
    pad_v, emb = table.shape
    out = jnp.zeros((pack * pad_v, pack * emb), table.dtype)
    for j in range(pack):
        out = out.at[j * pad_v:(j + 1) * pad_v, j * emb:(j + 1) * emb].set(table)
    return out


def _split_bf16_planes(x, n=3):
    """Split f32 array into n bf16 planes with x == sum(planes) exactly (n=3, normal range)."""
    planes, r = [], x
    for _ in range(n):
        p = r.astype(jnp.bfloat16)
        planes.append(p)
        r = r - p.astype(jnp.float32)
    return planes


def prepare_bond_encoder(tables):
    """Precompute the kernel operands from the per-feature embedding tables."""
    dims = [int(t.shape[0]) for t in tables]
    emb = int(tables[0].shape[1])
    total = 1
    for d in dims:
        total *= d

    # mixed-radix weights (feature 0 most significant): weights[i] = prod(dims[i+1:])
    weights, w = [], 1
    for d in reversed(dims):
        weights.append(w)
        w *= d
    weights = list(reversed(weights))

    # lane-packing factor: pack edges per 128-lane output row
    if emb < 128 and 128 % emb == 0:
        pack = 128 // emb
    else:
        pack = 1  # TODO(synk): emb_dim not dividing 128 falls back to masked (<128-lane) stores
    # TODO(synk): on v6e/v7x (256-wide MXU), pack = 256 // emb would fill the full MXU width.

    sub = 128 // pack if 128 % pack == 0 else 128
    pad_v = _round_up(total, sub)  # keeps K = pack*pad_v a multiple of 128

    # Combined table over all feature combinations: row c = sum_i tables[i][digit_i(c)].
    # TODO(synk): for feature-dim products too large to enumerate, fall back to a
    # per-feature multi-hot over a concatenated (fused) table instead.
    c = jnp.arange(total, dtype=jnp.int32)
    combined = jnp.zeros((total, emb), jnp.float32)
    for t, d, wi in zip(tables, dims, weights):
        combined = combined + t[(c // wi) % d]
    combined = jnp.pad(combined, ((0, pad_v - total), (0, 0)))

    bd = _block_diag(combined, pack)                 # [pack*pad_v, pack*emb] f32
    thi, tmid, tlo = _split_bf16_planes(bd, 3)       # exact 3-plane bf16 split

    return dict(table_hi=thi, table_mid=tmid, table_lo=tlo,
                weights=jnp.asarray(weights, jnp.int32),
                pack=pack, pad_v=pad_v, emb=emb)


def bond_encoder_forward(edge_feature, params, *, tile_e=8192):
    """edge_feature: [E, F] int32 categorical codes.
       params: output of prepare_bond_encoder.
       returns: [E, emb] f32."""
    E, F = edge_feature.shape
    pack, pad_v, emb = params["pack"], params["pad_v"], params["emb"]
    out_lanes = pack * emb

    chunk = 16 * pack                          # output-row granularity in edges
    tile_e = max(chunk, min(tile_e, _round_up(E, chunk)))
    tile_e = _round_up(tile_e, chunk)
    rows_per_tile = tile_e // pack
    E_pad = _round_up(E, tile_e)

    # Combined (mixed-radix) code per edge; padded edges point at row 0 (valid row,
    # their output rows are sliced off below).
    # TODO(synk): fuse this combine + offset add into the kernel to save ~8 B/edge of HBM traffic.
    idx = jnp.sum(edge_feature.astype(jnp.int32) * params["weights"][None, :], axis=1)
    idx = jnp.pad(idx, (0, E_pad - E))
    idx = idx.reshape(E_pad // pack, pack)                              # free row-major regroup
    idx = idx + (jnp.arange(pack, dtype=jnp.int32) * pad_v)[None, :]    # lane-group offsets

    thi, tmid, tlo = params["table_hi"], params["table_mid"], params["table_lo"]

    grid = (E_pad // tile_e,)
    out = pl.pallas_call(
        _bond_encoder_kernel,
        out_shape=jax.ShapeDtypeStruct((E_pad // pack, out_lanes), jnp.float32),
        grid_spec=pltpu.PrefetchScalarGridSpec(
            num_scalar_prefetch=0,
            grid=grid,
            in_specs=[
                pl.BlockSpec((rows_per_tile, pack), lambda e: (e, 0)),
                # Constant block index -> tables DMA'd once and kept resident in VMEM.
                pl.BlockSpec(thi.shape, lambda e: (0, 0)),
                pl.BlockSpec(tmid.shape, lambda e: (0, 0)),
                pl.BlockSpec(tlo.shape, lambda e: (0, 0)),
            ],
            out_specs=pl.BlockSpec((rows_per_tile, out_lanes), lambda e: (e, 0)),
        ),
        compiler_params=pltpu.CompilerParams(
            # TODO(synk): on v7x, explicit 2-TensorCore sharding (CORE_PARALLEL / pl.core_map)
            # over the edge axis would roughly double throughput on this compute-bound kernel.
            dimension_semantics=("parallel",),
            vmem_limit_bytes=32 * 1024 * 1024),
    )(idx, thi, tmid, tlo)

    # Free reshape back to the nn.Embedding layout; drop the padded edges.
    return out.reshape(E_pad, emb)[:E]


if __name__ == "__main__":
    key = jax.random.PRNGKey(0)
    emb_dim = 32
    num_edges = 1000   # deliberately not a multiple of the tile; padding handled in wrapper

    # deterministic parameters
    key, pkey = jax.random.split(key)
    tables = init_bond_encoder_params(pkey, emb_dim)
    params = prepare_bond_encoder(tables)

    # deterministic example input: categorical codes per bond feature
    cols = []
    for dim in FULL_BOND_FEATURE_DIMS:
        key, sub = jax.random.split(key)
        cols.append(jax.random.randint(sub, (num_edges,), 0, dim, jnp.int32))
    edge_feature = jnp.stack(cols, axis=1)  # [E, F] int32

    out = bond_encoder_forward(edge_feature, params)
    out = jax.block_until_ready(out)

    # pure-JAX reference (exact nn.Embedding gather + sum)
    ref = jnp.zeros((num_edges, emb_dim), jnp.float32)
    for i, t in enumerate(tables):
        ref = ref + t[edge_feature[:, i]]

    assert out.shape == (num_edges, emb_dim)
    err = float(jnp.max(jnp.abs(out - ref)))
    assert jnp.allclose(out, ref, atol=1e-5, rtol=1e-5), f"max abs err = {err}"
    print("KERNEL_OK")
</pallas_src>

<mosaic_0001>
module attributes {stable_mosaic.version = 11 : i64} {
  func.func @_bond_encoder_kernel(%arg0: i32, %arg1: memref<256x4xi32, #tpu.memory_space<vmem>>, %arg2: memref<256x128xbf16, #tpu.memory_space<vmem>>, %arg3: memref<256x128xbf16, #tpu.memory_space<vmem>>, %arg4: memref<256x128xbf16, #tpu.memory_space<vmem>>, %arg5: memref<256x128xf32, #tpu.memory_space<vmem>>) attributes {dimension_semantics = [#tpu.dimension_semantics<parallel>], iteration_bounds = array<i64: 1>, scalar_prefetch = 0 : i64, scratch_operands = 0 : i64, tpu.core_type = #tpu.core_type<tc>, window_params = [{transform_indices = @transform_0, window_bounds = array<i64: 256, 4>}, {pipeline_mode = #tpu.pipeline_mode<synchronous>, transform_indices = @transform_1, window_bounds = array<i64: 256, 128>}, {pipeline_mode = #tpu.pipeline_mode<synchronous>, transform_indices = @transform_2, window_bounds = array<i64: 256, 128>}, {pipeline_mode = #tpu.pipeline_mode<synchronous>, transform_indices = @transform_3, window_bounds = array<i64: 256, 128>}, {transform_indices = @transform_4, window_bounds = array<i64: 256, 128>}]} {
    %c0 = arith.constant 0 : index
    %c0_0 = arith.constant 0 : index
    %0 = vector.load %arg1[%c0, %c0_0] : memref<256x4xi32, #tpu.memory_space<vmem>>, vector<256x4xi32>
    %1 = tpu.iota {dimensions = array<i32: 1>} : vector<256x256xi32>
    %2 = vector.extract_strided_slice %0 {offsets = [0, 0], sizes = [256, 1], strides = [1, 1]} : vector<256x4xi32> to vector<256x1xi32>
    %3 = vector.broadcast %2 : vector<256x1xi32> to vector<256x256xi32>
    %4 = arith.cmpi eq, %3, %1 : vector<256x256xi32>
    %5 = vector.extract_strided_slice %0 {offsets = [0, 1], sizes = [256, 1], strides = [1, 1]} : vector<256x4xi32> to vector<256x1xi32>
    %6 = vector.broadcast %5 : vector<256x1xi32> to vector<256x256xi32>
    %7 = arith.cmpi eq, %6, %1 : vector<256x256xi32>
    %8 = arith.ori %4, %7 : vector<256x256xi1>
    %9 = vector.extract_strided_slice %0 {offsets = [0, 2], sizes = [256, 1], strides = [1, 1]} : vector<256x4xi32> to vector<256x1xi32>
    %10 = vector.broadcast %9 : vector<256x1xi32> to vector<256x256xi32>
    %11 = arith.cmpi eq, %10, %1 : vector<256x256xi32>
    %12 = arith.ori %8, %11 : vector<256x256xi1>
    %13 = vector.extract_strided_slice %0 {offsets = [0, 3], sizes = [256, 1], strides = [1, 1]} : vector<256x4xi32> to vector<256x1xi32>
    %14 = vector.broadcast %13 : vector<256x1xi32> to vector<256x256xi32>
    %15 = arith.cmpi eq, %14, %1 : vector<256x256xi32>
    %16 = arith.ori %12, %15 : vector<256x256xi1>
    %17 = arith.extui %16 : vector<256x256xi1> to vector<256x256xi32>
    %18 = arith.sitofp %17 : vector<256x256xi32> to vector<256x256xf32>
    %19 = arith.truncf %18 : vector<256x256xf32> to vector<256x256xbf16>
    %c0_1 = arith.constant 0 : index
    %c0_2 = arith.constant 0 : index
    %20 = vector.load %arg2[%c0_1, %c0_2] : memref<256x128xbf16, #tpu.memory_space<vmem>>, vector<256x128xbf16>
    %cst = arith.constant dense<0.000000e+00> : vector<256x128xf32>
    %21 = tpu.matmul %19, %20, %cst {dimension_numbers = #tpu.dot_dimension_numbers<[1], [0], [0], [1], [0, 0, 1, 1], [], []>} : vector<256x256xbf16>, vector<256x128xbf16>, vector<256x128xf32> -> vector<256x128xf32>
    %c0_3 = arith.constant 0 : index
    %c0_4 = arith.constant 0 : index
    %22 = vector.load %arg3[%c0_3, %c0_4] : memref<256x128xbf16, #tpu.memory_space<vmem>>, vector<256x128xbf16>
    %cst_5 = arith.constant dense<0.000000e+00> : vector<256x128xf32>
    %23 = tpu.matmul %19, %22, %cst_5 {dimension_numbers = #tpu.dot_dimension_numbers<[1], [0], [0], [1], [0, 0, 1, 1], [], []>} : vector<256x256xbf16>, vector<256x128xbf16>, vector<256x128xf32> -> vector<256x128xf32>
    %24 = arith.addf %21, %23 : vector<256x128xf32>
    %c0_6 = arith.constant 0 : index
    %c0_7 = arith.constant 0 : index
    %25 = vector.load %arg4[%c0_6, %c0_7] : memref<256x128xbf16, #tpu.memory_space<vmem>>, vector<256x128xbf16>
    %cst_8 = arith.constant dense<0.000000e+00> : vector<256x128xf32>
    %26 = tpu.matmul %19, %25, %cst_8 {dimension_numbers = #tpu.dot_dimension_numbers<[1], [0], [0], [1], [0, 0, 1, 1], [], []>} : vector<256x256xbf16>, vector<256x128xbf16>, vector<256x128xf32> -> vector<256x128xf32>
    %27 = arith.addf %24, %26 : vector<256x128xf32>
    %c0_9 = arith.constant 0 : index
    %c0_10 = arith.constant 0 : index
    %28 = vector.load %arg5[%c0_9, %c0_10] : memref<256x128xf32, #tpu.memory_space<vmem>>, vector<256x128xf32>
    tpu.vector_store %arg5[%c0_9, %c0_10], %27 {strides = array<i32>} : memref<256x128xf32, #tpu.memory_space<vmem>>, vector<256x128xf32>,
    return
  }
  func.func @transform_0(%arg0: i32) -> (i32, i32) {
    %c0_i32 = arith.constant 0 : i32
    %c0_i32_0 = arith.constant 0 : i32
    return %arg0, %c0_i32 : i32, i32
  }
  func.func @transform_1(%arg0: i32) -> (i32, i32) {
    %c0_i32 = arith.constant 0 : i32
    %c0_i32_0 = arith.constant 0 : i32
    %c0_i32_1 = arith.constant 0 : i32
    return %c0_i32, %c0_i32_0 : i32, i32
  }
  func.func @transform_2(%arg0: i32) -> (i32, i32) {
    %c0_i32 = arith.constant 0 : i32
    %c0_i32_0 = arith.constant 0 : i32
    %c0_i32_1 = arith.constant 0 : i32
    return %c0_i32, %c0_i32_0 : i32, i32
  }
  func.func @transform_3(%arg0: i32) -> (i32, i32) {
    %c0_i32 = arith.constant 0 : i32
    %c0_i32_0 = arith.constant 0 : i32
    %c0_i32_1 = arith.constant 0 : i32
    return %c0_i32, %c0_i32_0 : i32, i32
  }
  func.func @transform_4(%arg0: i32) -> (i32, i32) {
    %c0_i32 = arith.constant 0 : i32
    %c0_i32_0 = arith.constant 0 : i32
    return %arg0, %c0_i32 : i32, i32
  }
}

</mosaic_0001>

<llo_original>
// kernel: tpu_custom_call.1
$region0: #{tpu_custom_call.1}
  #allocation0 [shape = 'u32[]', space=smem, size = 0x4, offset = 0x4, fixed_abs, tag = 'smem constant byte address 0x4 - core index']
  #allocation1 [shape = 'u32[72,128]{1,0:T(1,128)}', space=vmem, size = 0x9000, scoped, tag = 'internal scratch']
  %s0 = inlined_call_operand.vmem [shape: s32[256,4], index: 0, kind: input, shape index: {}]
  %s1 = inlined_call_operand.vmem [shape: bf16[256,128], index: 1, kind: input, shape index: {}]
  %s2 = inlined_call_operand.vmem [shape: bf16[256,128], index: 2, kind: input, shape index: {}]
  %s3 = inlined_call_operand.hbm [shape: bf16[256,128], index: 3, kind: input, shape index: {}]
  %s4 = inlined_call_operand.hbm [shape: f32[256,128], index: 4, kind: output, shape index: {}]
  %s5 = sld [smem:[#allocation0]]
  $region30: #{tpu_custom_call.1} parent=0
    _
  %s7 = ssub.s32 1, %s5
  %s8 = scalar_select 0, %s7, %s5
  $region1: #{tpu_custom_call.1} parent=0
    #allocation2 [shape = 'u8[65536]{0}', space=vmem, size = 0x10000, scoped, tag = 'input window, operand 3, single buffered']
    #allocation3 [shape = 's32[1]{0}', space=sflag, size = 0x4, scoped, tag = 'scoped memory for tpu_custom_call.1']
    #allocation4 [shape = 's32[1]{0}', space=sflag, size = 0x4, scoped, tag = 'scoped memory for tpu_custom_call.1']
    #allocation5 [shape = 'u8[131072]{0}', space=vmem, size = 0x20000, scoped, tag = 'output window, operand 0, single buffered']
    %9 = vsyncpa [#allocation3], 0
    %10 = vsyncpa [#allocation4], 0
    // Predicated region
    $region2: #{tpu_custom_call.1} parent=1 // pred_check
      _
    $region3: #{tpu_custom_call.1} parent=1 // pred_check_branch
      %12 = sbr.rel (0) target = $region5
    $region4: #{tpu_custom_call.1} parent=1 // pred_region
      _
    $region5: #{tpu_custom_call.1} parent=1 // pred_fallthru
      _
    // Predicated region
    $region6: #{tpu_custom_call.1} parent=1 // pred_check
      _
    $region7: #{tpu_custom_call.1} parent=1 // pred_check_branch
      %14 = sbr.rel (0) target = $region9
    $region8: #{tpu_custom_call.1} parent=1 // pred_region
      _
    $region9: #{tpu_custom_call.1} parent=1 // pred_fallthru
      _
    // Predicated region
    $region10: #{tpu_custom_call.1} parent=1 // pred_check
      _
    $region11: #{tpu_custom_call.1} parent=1 // pred_check_branch
      %16 = sbr.rel (0) target = $region13
    $region12: #{tpu_custom_call.1} parent=1 // pred_region
      _
    $region13: #{tpu_custom_call.1} parent=1 // pred_fallthru
      _
    // Predicated region
    $region14: #{tpu_custom_call.1} parent=1 // pred_check
      _
    $region15: #{tpu_custom_call.1} parent=1 // pred_check_branch
      %18 = sbr.rel (0) target = $region17
    $region16: #{tpu_custom_call.1} parent=1 // pred_region
      %20 = vsyncadd [#allocation3], 0
      %s21 = sshll.u32 %s3, 4
      %s22 = int_to_ptr.hbm [resolvable:$true] %s21
      %s23 = sshll.u32 [#allocation2], 4
      %s24 = int_to_ptr.vmem [resolvable:$true] %s23
      %29 = dma.hbm_to_vmem [thread:$0]  %s22, 2048, %s24, [#allocation3], 64, 64, 4
    $region17: #{tpu_custom_call.1} parent=1 // pred_fallthru
      _
    // Predicated region
    $region18: #{tpu_custom_call.1} parent=1 // pred_check
      _
    $region19: #{tpu_custom_call.1} parent=1 // pred_check_branch
      %31 = sbr.rel (0) target = $region21
    $region20: #{tpu_custom_call.1} parent=1 // pred_region
      %33 = dma.done [#allocation3], 2048
    $region21: #{tpu_custom_call.1} parent=1 // pred_fallthru
      _
    %v34 = vld [vmem:[%s0] sm:$0xff]
    %v35 = vld [vmem:[%s0 + $0x8] sm:$0xff]
    %v36 = vld [vmem:[%s0 + $0x10] sm:$0xff]
    %v37 = vld [vmem:[%s0 + $0x18] sm:$0xff]
    %v38 = vld [vmem:[%s0 + $0x20] sm:$0xff]
    %v39 = vld [vmem:[%s0 + $0x28] sm:$0xff]
    %v40 = vld [vmem:[%s0 + $0x30] sm:$0xff]
    %v41 = vld [vmem:[%s0 + $0x38] sm:$0xff]
    %v42 = vld [vmem:[%s0 + $0x40] sm:$0xff]
    %v43 = vld [vmem:[%s0 + $0x48] sm:$0xff]
    %v44 = vld [vmem:[%s0 + $0x50] sm:$0xff]
    %v45 = vld [vmem:[%s0 + $0x58] sm:$0xff]
    %v46 = vld [vmem:[%s0 + $0x60] sm:$0xff]
    %v47 = vld [vmem:[%s0 + $0x68] sm:$0xff]
    %v48 = vld [vmem:[%s0 + $0x70] sm:$0xff]
    %v49 = vld [vmem:[%s0 + $0x78] sm:$0xff]
    %v50 = vld [vmem:[%s0 + $0x80] sm:$0xff]
    %v51 = vld [vmem:[%s0 + $0x88] sm:$0xff]
    %v52 = vld [vmem:[%s0 + $0x90] sm:$0xff]
    %v53 = vld [vmem:[%s0 + $0x98] sm:$0xff]
    %v54 = vld [vmem:[%s0 + $0xa0] sm:$0xff]
    %v55 = vld [vmem:[%s0 + $0xa8] sm:$0xff]
    %v56 = vld [vmem:[%s0 + $0xb0] sm:$0xff]
    %v57 = vld [vmem:[%s0 + $0xb8] sm:$0xff]
    %v58 = vld [vmem:[%s0 + $0xc0] sm:$0xff]
    %v59 = vld [vmem:[%s0 + $0xc8] sm:$0xff]
    %v60 = vld [vmem:[%s0 + $0xd0] sm:$0xff]
    %v61 = vld [vmem:[%s0 + $0xd8] sm:$0xff]
    %v62 = vld [vmem:[%s0 + $0xe0] sm:$0xff]
    %v63 = vld [vmem:[%s0 + $0xe8] sm:$0xff]
    %v64 = vld [vmem:[%s0 + $0xf0] sm:$0xff]
    %v65 = vld [vmem:[%s0 + $0xf8] sm:$0xff]
    %v66 = vlaneseq
    %v67 = vand.u32 %v66, 127
    %v68 = vadd.s32 %v67, 128
    %69 = vset.pattern.permute.xlu0 0
    %70 = vperm.xlu0 %69, %v34
    %v71 = vpop.permute.xlu0 %70
    %72 = vset.pattern.permute.xlu0 0
    %73 = vperm.xlu0 %72, %v35
    %v74 = vpop.permute.xlu0 %73
    %75 = vset.pattern.permute.xlu0 0
    %76 = vperm.xlu0 %75, %v36
    %v77 = vpop.permute.xlu0 %76
    %78 = vset.pattern.permute.xlu0 0
    %79 = vperm.xlu0 %78, %v37
    %v80 = vpop.permute.xlu0 %79
    %81 = vset.pattern.permute.xlu0 0
    %82 = vperm.xlu0 %81, %v38
    %v83 = vpop.permute.xlu0 %82
    %84 = vset.pattern.permute.xlu0 0
    %85 = vperm.xlu0 %84, %v39
    %v86 = vpop.permute.xlu0 %85
    %87 = vset.pattern.permute.xlu0 0
    %88 = vperm.xlu0 %87, %v40
    %v89 = vpop.permute.xlu0 %88
    %90 = vset.pattern.permute.xlu0 0
    %91 = vperm.xlu0 %90, %v41
    %v92 = vpop.permute.xlu0 %91
    %93 = vset.pattern.permute.xlu0 0
    %94 = vperm.xlu0 %93, %v42
    %v95 = vpop.permute.xlu0 %94
    %96 = vset.pattern.permute.xlu0 0
    %97 = vperm.xlu0 %96, %v43
    %v98 = vpop.permute.xlu0 %97
    %99 = vset.pattern.permute.xlu0 0
    %100 = vperm.xlu0 %99, %v44
    %v101 = vpop.permute.xlu0 %100
    %102 = vset.pattern.permute.xlu0 0
    %103 = vperm.xlu0 %102, %v45
    %v104 = vpop.permute.xlu0 %103
    %105 = vset.pattern.permute.xlu0 0
    %106 = vperm.xlu0 %105, %v46
    %v107 = vpop.permute.xlu0 %106
    %108 = vset.pattern.permute.xlu0 0
    %109 = vperm.xlu0 %108, %v47
    %v110 = vpop.permute.xlu0 %109
    %111 = vset.pattern.permute.xlu0 0
    %112 = vperm.xlu0 %111, %v48
    %v113 = vpop.permute.xlu0 %112
    %114 = vset.pattern.permute.xlu0 0
    %115 = vperm.xlu0 %114, %v49
    %v116 = vpop.permute.xlu0 %115
    %117 = vset.pattern.permute.xlu0 0
    %118 = vperm.xlu0 %117, %v50
    %v119 = vpop.permute.xlu0 %118
    %120 = vset.pattern.permute.xlu0 0
    %121 = vperm.xlu0 %120, %v51
    %v122 = vpop.permute.xlu0 %121
    %123 = vset.pattern.permute.xlu0 0
    %124 = vperm.xlu0 %123, %v52
    %v125 = vpop.permute.xlu0 %124
    %126 = vset.pattern.permute.xlu0 0
    %127 = vperm.xlu0 %126, %v53
    %v128 = vpop.permute.xlu0 %127
    %129 = vset.pattern.permute.xlu0 0
    %130 = vperm.xlu0 %129, %v54
    %v131 = vpop.permute.xlu0 %130
    %132 = vset.pattern.permute.xlu0 0
    %133 = vperm.xlu0 %132, %v55
    %v134 = vpop.permute.xlu0 %133
    %135 = vset.pattern.permute.xlu0 0
    %136 = vperm.xlu0 %135, %v56
    %v137 = vpop.permute.xlu0 %136
    %138 = vset.pattern.permute.xlu0 0
    %139 = vperm.xlu0 %138, %v57
    %v140 = vpop.permute.xlu0 %139
    %141 = vset.pattern.permute.xlu0 0
    %142 = vperm.xlu0 %141, %v58
    %v143 = vpop.permute.xlu0 %142
    %144 = vset.pattern.permute.xlu0 0
    %145 = vperm.xlu0 %144, %v59
    %v146 = vpop.permute.xlu0 %145
    %147 = vset.pattern.permute.xlu0 0
    %148 = vperm.xlu0 %147, %v60
    %v149 = vpop.permute.xlu0 %148
    %150 = vset.pattern.permute.xlu0 0
    %151 = vperm.xlu0 %150, %v61
    %v152 = vpop.permute.xlu0 %151
    %153 = vset.pattern.permute.xlu0 0
    %154 = vperm.xlu0 %153, %v62
    %v155 = vpop.permute.xlu0 %154
    %156 = vset.pattern.permute.xlu0 0
    %157 = vperm.xlu0 %156, %v63
    %v158 = vpop.permute.xlu0 %157
    %159 = vset.pattern.permute.xlu0 0
    %160 = vperm.xlu0 %159, %v64
    %v161 = vpop.permute.xlu0 %160
    %162 = vset.pattern.permute.xlu0 0
    %163 = vperm.xlu0 %162, %v65
    %v164 = vpop.permute.xlu0 %163
    %vm165 = vcmp.eq.s32.totalorder %v71, %v67
    %vm166 = vcmp.eq.s32.totalorder %v71, %v68
    %vm167 = vcmp.eq.s32.totalorder %v74, %v67
    %vm168 = vcmp.eq.s32.totalorder %v74, %v68
    %vm169 = vcmp.eq.s32.totalorder %v77, %v67
    %vm170 = vcmp.eq.s32.totalorder %v77, %v68
    %vm171 = vcmp.eq.s32.totalorder %v80, %v67
    %vm172 = vcmp.eq.s32.totalorder %v80, %v68
    %vm173 = vcmp.eq.s32.totalorder %v83, %v67
    %vm174 = vcmp.eq.s32.totalorder %v83, %v68
    %vm175 = vcmp.eq.s32.totalorder %v86, %v67
    %vm176 = vcmp.eq.s32.totalorder %v86, %v68
    %vm177 = vcmp.eq.s32.totalorder %v89, %v67
    %vm178 = vcmp.eq.s32.totalorder %v89, %v68
    %vm179 = vcmp.eq.s32.totalorder %v92, %v67
    %vm180 = vcmp.eq.s32.totalorder %v92, %v68
    %vm181 = vcmp.eq.s32.totalorder %v95, %v67
    %vm182 = vcmp.eq.s32.totalorder %v95, %v68
    %vm183 = vcmp.eq.s32.totalorder %v98, %v67
    %vm184 = vcmp.eq.s32.totalorder %v98, %v68
    %vm185 = vcmp.eq.s32.totalorder %v101, %v67
    %vm186 = vcmp.eq.s32.totalorder %v101, %v68
    %vm187 = vcmp.eq.s32.totalorder %v104, %v67
    %vm188 = vcmp.eq.s32.totalorder %v104, %v68
    %vm189 = vcmp.eq.s32.totalorder %v107, %v67
    %vm190 = vcmp.eq.s32.totalorder %v107, %v68
    %vm191 = vcmp.eq.s32.totalorder %v110, %v67
    %vm192 = vcmp.eq.s32.totalorder %v110, %v68
    %vm193 = vcmp.eq.s32.totalorder %v113, %v67
    %vm194 = vcmp.eq.s32.totalorder %v113, %v68
    %vm195 = vcmp.eq.s32.totalorder %v116, %v67
    %vm196 = vcmp.eq.s32.totalorder %v116, %v68
    %vm197 = vcmp.eq.s32.totalorder %v119, %v67
    %vm198 = vcmp.eq.s32.totalorder %v119, %v68
    %vm199 = vcmp.eq.s32.totalorder %v122, %v67
    %vm200 = vcmp.eq.s32.totalorder %v122, %v68
    %vm201 = vcmp.eq.s32.totalorder %v125, %v67
    %vm202 = vcmp.eq.s32.totalorder %v125, %v68
    %vm203 = vcmp.eq.s32.totalorder %v128, %v67
    %vm204 = vcmp.eq.s32.totalorder %v128, %v68
    %vm205 = vcmp.eq.s32.totalorder %v131, %v67
    %vm206 = vcmp.eq.s32.totalorder %v131, %v68
    %vm207 = vcmp.eq.s32.totalorder %v134, %v67
    %vm208 = vcmp.eq.s32.totalorder %v134, %v68
    %vm209 = vcmp.eq.s32.totalorder %v137, %v67
    %vm210 = vcmp.eq.s32.totalorder %v137, %v68
    %vm211 = vcmp.eq.s32.totalorder %v140, %v67
    %vm212 = vcmp.eq.s32.totalorder %v140, %v68
    %vm213 = vcmp.eq.s32.totalorder %v143, %v67
    %vm214 = vcmp.eq.s32.totalorder %v143, %v68
    %vm215 = vcmp.eq.s32.totalorder %v146, %v67
    %vm216 = vcmp.eq.s32.totalorder %v146, %v68
    %vm217 = vcmp.eq.s32.totalorder %v149, %v67
    %vm218 = vcmp.eq.s32.totalorder %v149, %v68
    %vm219 = vcmp.eq.s32.totalorder %v152, %v67
    %vm220 = vcmp.eq.s32.totalorder %v152, %v68
    %vm221 = vcmp.eq.s32.totalorder %v155, %v67
    %vm222 = vcmp.eq.s32.totalorder %v155, %v68
    %vm223 = vcmp.eq.s32.totalorder %v158, %v67
    %vm224 = vcmp.eq.s32.totalorder %v158, %v68
    %vm225 = vcmp.eq.s32.totalorder %v161, %v67
    %vm226 = vcmp.eq.s32.totalorder %v161, %v68
    %vm227 = vcmp.eq.s32.totalorder %v164, %v67
    %vm228 = vcmp.eq.s32.totalorder %v164, %v68
    %229 = vset.pattern.permute.xlu0 1
    %230 = vperm.xlu0 %229, %v34
    %v231 = vpop.permute.xlu0 %230
    %232 = vset.pattern.permute.xlu0 1
    %233 = vperm.xlu0 %232, %v35
    %v234 = vpop.permute.xlu0 %233
    %235 = vset.pattern.permute.xlu0 1
    %236 = vperm.xlu0 %235, %v36
    %v237 = vpop.permute.xlu0 %236
    %238 = vset.pattern.permute.xlu0 1
    %239 = vperm.xlu0 %238, %v37
    %v240 = vpop.permute.xlu0 %239
    %241 = vset.pattern.permute.xlu0 1
    %242 = vperm.xlu0 %241, %v38
    %v243 = vpop.permute.xlu0 %242
    %244 = vset.pattern.permute.xlu0 1
    %245 = vperm.xlu0 %244, %v39
    %v246 = vpop.permute.xlu0 %245
    %247 = vset.pattern.permute.xlu0 1
    %248 = vperm.xlu0 %247, %v40
    %v249 = vpop.permute.xlu0 %248
    %250 = vset.pattern.permute.xlu0 1
    %251 = vperm.xlu0 %250, %v41
    %v252 = vpop.permute.xlu0 %251
    %253 = vset.pattern.permute.xlu0 1
    %254 = vperm.xlu0 %253, %v42
    %v255 = vpop.permute.xlu0 %254
    %256 = vset.pattern.permute.xlu0 1
    %257 = vperm.xlu0 %256, %v43
    %v258 = vpop.permute.xlu0 %257
    %259 = vset.pattern.permute.xlu0 1
    %260 = vperm.xlu0 %259, %v44
    %v261 = vpop.permute.xlu0 %260
    %262 = vset.pattern.permute.xlu0 1
    %263 = vperm.xlu0 %262, %v45
    %v264 = vpop.permute.xlu0 %263
    %265 = vset.pattern.permute.xlu0 1
    %266 = vperm.xlu0 %265, %v46
    %v267 = vpop.permute.xlu0 %266
    %268 = vset.pattern.permute.xlu0 1
    %269 = vperm.xlu0 %268, %v47
    %v270 = vpop.permute.xlu0 %269
    %271 = vset.pattern.permute.xlu0 1
    %272 = vperm.xlu0 %271, %v48
    %v273 = vpop.permute.xlu0 %272
    %274 = vset.pattern.permute.xlu0 1
    %275 = vperm.xlu0 %274, %v49
    %v276 = vpop.permute.xlu0 %275
    %277 = vset.pattern.permute.xlu0 1
    %278 = vperm.xlu0 %277, %v50
    %v279 = vpop.permute.xlu0 %278
    %280 = vset.pattern.permute.xlu0 1
    %281 = vperm.xlu0 %280, %v51
    %v282 = vpop.permute.xlu0 %281
    %283 = vset.pattern.permute.xlu0 1
    %284 = vperm.xlu0 %283, %v52
    %v285 = vpop.permute.xlu0 %284
    %286 = vset.pattern.permute.xlu0 1
    %287 = vperm.xlu0 %286, %v53
    %v288 = vpop.permute.xlu0 %287
    %289 = vset.pattern.permute.xlu0 1
    %290 = vperm.xlu0 %289, %v54
    %v291 = vpop.permute.xlu0 %290
    %292 = vset.pattern.permute.xlu0 1
    %293 = vperm.xlu0 %292, %v55
    %v294 = vpop.permute.xlu0 %293
    %295 = vset.pattern.permute.xlu0 1
    %296 = vperm.xlu0 %295, %v56
    %v297 = vpop.permute.xlu0 %296
    %298 = vset.pattern.permute.xlu0 1
    %299 = vperm.xlu0 %298, %v57
    %v300 = vpop.permute.xlu0 %299
    %301 = vset.pattern.permute.xlu0 1
    %302 = vperm.xlu0 %301, %v58
    %v303 = vpop.permute.xlu0 %302
    %304 = vset.pattern.permute.xlu0 1
    %305 = vperm.xlu0 %304, %v59
    %v306 = vpop.permute.xlu0 %305
    %307 = vset.pattern.permute.xlu0 1
    %308 = vperm.xlu0 %307, %v60
    %v309 = vpop.permute.xlu0 %308
    %310 = vset.pattern.permute.xlu0 1
    %311 = vperm.xlu0 %310, %v61
    %v312 = vpop.permute.xlu0 %311
    %313 = vset.pattern.permute.xlu0 1
    %314 = vperm.xlu0 %313, %v62
    %v315 = vpop.permute.xlu0 %314
    %316 = vset.pattern.permute.xlu0 1
    %317 = vperm.xlu0 %316, %v63
    %v318 = vpop.permute.xlu0 %317
    %319 = vset.pattern.permute.xlu0 1
    %320 = vperm.xlu0 %319, %v64
    %v321 = vpop.permute.xlu0 %320
    %322 = vset.pattern.permute.xlu0 1
    %323 = vperm.xlu0 %322, %v65
    %v324 = vpop.permute.xlu0 %323
    %vm325 = vcmp.eq.s32.totalorder %v231, %v67
    %vm326 = vcmp.eq.s32.totalorder %v231, %v68
    %vm327 = vcmp.eq.s32.totalorder %v234, %v67
    %vm328 = vcmp.eq.s32.totalorder %v234, %v68
    %vm329 = vcmp.eq.s32.totalorder %v237, %v67
    %vm330 = vcmp.eq.s32.totalorder %v237, %v68
    %vm331 = vcmp.eq.s32.totalorder %v240, %v67
    %vm332 = vcmp.eq.s32.totalorder %v240, %v68
    %vm333 = vcmp.eq.s32.totalorder %v243, %v67
    %vm334 = vcmp.eq.s32.totalorder %v243, %v68
    %vm335 = vcmp.eq.s32.totalorder %v246, %v67
    %vm336 = vcmp.eq.s32.totalorder %v246, %v68
    %vm337 = vcmp.eq.s32.totalorder %v249, %v67
    %vm338 = vcmp.eq.s32.totalorder %v249, %v68
    %vm339 = vcmp.eq.s32.totalorder %v252, %v67
    %vm340 = vcmp.eq.s32.totalorder %v252, %v68
    %vm341 = vcmp.eq.s32.totalorder %v255, %v67
    %vm342 = vcmp.eq.s32.totalorder %v255, %v68
    %vm343 = vcmp.eq.s32.totalorder %v258, %v67
    %vm344 = vcmp.eq.s32.totalorder %v258, %v68
    %vm345 = vcmp.eq.s32.totalorder %v261, %v67
    %vm346 = vcmp.eq.s32.totalorder %v261, %v68
    %vm347 = vcmp.eq.s32.totalorder %v264, %v67
    %vm348 = vcmp.eq.s32.totalorder %v264, %v68
    %vm349 = vcmp.eq.s32.totalorder %v267, %v67
    %vm350 = vcmp.eq.s32.totalorder %v267, %v68
    %vm351 = vcmp.eq.s32.totalorder %v270, %v67
    %vm352 = vcmp.eq.s32.totalorder %v270, %v68
    %vm353 = vcmp.eq.s32.totalorder %v273, %v67
    %vm354 = vcmp.eq.s32.totalorder %v273, %v68
    %vm355 = vcmp.eq.s32.totalorder %v276, %v67
    %vm356 = vcmp.eq.s32.totalorder %v276, %v68
    %vm357 = vcmp.eq.s32.totalorder %v279, %v67
    %vm358 = vcmp.eq.s32.totalorder %v279, %v68
    %vm359 = vcmp.eq.s32.totalorder %v282, %v67
    %vm360 = vcmp.eq.s32.totalorder %v282, %v68
    %vm361 = vcmp.eq.s32.totalorder %v285, %v67
    %vm362 = vcmp.eq.s32.totalorder %v285, %v68
    %vm363 = vcmp.eq.s32.totalorder %v288, %v67
    %vm364 = vcmp.eq.s32.totalorder %v288, %v68
    %vm365 = vcmp.eq.s32.totalorder %v291, %v67
    %vm366 = vcmp.eq.s32.totalorder %v291, %v68
    %vm367 = vcmp.eq.s32.totalorder %v294, %v67
    %vm368 = vcmp.eq.s32.totalorder %v294, %v68
    %vm369 = vcmp.eq.s32.totalorder %v297, %v67
    %vm370 = vcmp.eq.s32.totalorder %v297, %v68
    %vm371 = vcmp.eq.s32.totalorder %v300, %v67
    %vm372 = vcmp.eq.s32.totalorder %v300, %v68
    %vm373 = vcmp.eq.s32.totalorder %v303, %v67
    %vm374 = vcmp.eq.s32.totalorder %v303, %v68
    %vm375 = vcmp.eq.s32.totalorder %v306, %v67
    %vm376 = vcmp.eq.s32.totalorder %v306, %v68
    %vm377 = vcmp.eq.s32.totalorder %v309, %v67
    %vm378 = vcmp.eq.s32.totalorder %v309, %v68
    %vm379 = vcmp.eq.s32.totalorder %v312, %v67
    %vm380 = vcmp.eq.s32.totalorder %v312, %v68
    %vm381 = vcmp.eq.s32.totalorder %v315, %v67
    %vm382 = vcmp.eq.s32.totalorder %v315, %v68
    %vm383 = vcmp.eq.s32.totalorder %v318, %v67
    %vm384 = vcmp.eq.s32.totalorder %v318, %v68
    %vm385 = vcmp.eq.s32.totalorder %v321, %v67
    %vm386 = vcmp.eq.s32.totalorder %v321, %v68
    %vm387 = vcmp.eq.s32.totalorder %v324, %v67
    %vm388 = vcmp.eq.s32.totalorder %v324, %v68
    %vm389 = vmor %vm165, %vm325
    %vm390 = vmor %vm166, %vm326
    %vm391 = vmor %vm167, %vm327
    %vm392 = vmor %vm168, %vm328
    %vm393 = vmor %vm169, %vm329
    %vm394 = vmor %vm170, %vm330
    %vm395 = vmor %vm171, %vm331
    %vm396 = vmor %vm172, %vm332
    %vm397 = vmor %vm173, %vm333
    %vm398 = vmor %vm174, %vm334
    %vm399 = vmor %vm175, %vm335
    %vm400 = vmor %vm176, %vm336
    %vm401 = vmor %vm177, %vm337
    %vm402 = vmor %vm178, %vm338
    %vm403 = vmor %vm179, %vm339
    %vm404 = vmor %vm180, %vm340
    %vm405 = vmor %vm181, %vm341
    %vm406 = vmor %vm182, %vm342
    %vm407 = vmor %vm183, %vm343
    %vm408 = vmor %vm184, %vm344
    %vm409 = vmor %vm185, %vm345
    %vm410 = vmor %vm186, %vm346
    %vm411 = vmor %vm187, %vm347
    %vm412 = vmor %vm188, %vm348
    %vm413 = vmor %vm189, %vm349
    %vm414 = vmor %vm190, %vm350
    %vm415 = vmor %vm191, %vm351
    %vm416 = vmor %vm192, %vm352
    %vm417 = vmor %vm193, %vm353
    %vm418 = vmor %vm194, %vm354
    %vm419 = vmor %vm195, %vm355
    %vm420 = vmor %vm196, %vm356
    %vm421 = vmor %vm197, %vm357
    %vm422 = vmor %vm198, %vm358
    %vm423 = vmor %vm199, %vm359
    %vm424 = vmor %vm200, %vm360
    %vm425 = vmor %vm201, %vm361
    %vm426 = vmor %vm202, %vm362
    %vm427 = vmor %vm203, %vm363
    %vm428 = vmor %vm204, %vm364
    %vm429 = vmor %vm205, %vm365
    %vm430 = vmor %vm206, %vm366
    %vm431 = vmor %vm207, %vm367
    %vm432 = vmor %vm208, %vm368
    %vm433 = vmor %vm209, %vm369
    %vm434 = vmor %vm210, %vm370
    %vm435 = vmor %vm211, %vm371
    %vm436 = vmor %vm212, %vm372
    %vm437 = vmor %vm213, %vm373
    %vm438 = vmor %vm214, %vm374
    %vm439 = vmor %vm215, %vm375
    %vm440 = vmor %vm216, %vm376
    %vm441 = vmor %vm217, %vm377
    %vm442 = vmor %vm218, %vm378
    %vm443 = vmor %vm219, %vm379
    %vm444 = vmor %vm220, %vm380
    %vm445 = vmor %vm221, %vm381
    %vm446 = vmor %vm222, %vm382
    %vm447 = vmor %vm223, %vm383
    %vm448 = vmor %vm224, %vm384
    %vm449 = vmor %vm225, %vm385
    %vm450 = vmor %vm226, %vm386
    %vm451 = vmor %vm227, %vm387
    %vm452 = vmor %vm228, %vm388
    %453 = vset.pattern.permute.xlu0 2
    %454 = vperm.xlu0 %453, %v34
    %v455 = vpop.permute.xlu0 %454
    %456 = vset.pattern.permute.xlu0 2
    %457 = vperm.xlu0 %456, %v35
    %v458 = vpop.permute.xlu0 %457
    %459 = vset.pattern.permute.xlu0 2
    %460 = vperm.xlu0 %459, %v36
    %v461 = vpop.permute.xlu0 %460
    %462 = vset.pattern.permute.xlu0 2
    %463 = vperm.xlu0 %462, %v37
    %v464 = vpop.permute.xlu0 %463
    %465 = vset.pattern.permute.xlu0 2
    %466 = vperm.xlu0 %465, %v38
    %v467 = vpop.permute.xlu0 %466
    %468 = vset.pattern.permute.xlu0 2
    %469 = vperm.xlu0 %468, %v39
    %v470 = vpop.permute.xlu0 %469
    %471 = vset.pattern.permute.xlu0 2
    %472 = vperm.xlu0 %471, %v40
    %v473 = vpop.permute.xlu0 %472
    %474 = vset.pattern.permute.xlu0 2
    %475 = vperm.xlu0 %474, %v41
    %v476 = vpop.permute.xlu0 %475
    %477 = vset.pattern.permute.xlu0 2
    %478 = vperm.xlu0 %477, %v42
    %v479 = vpop.permute.xlu0 %478
    %480 = vset.pattern.permute.xlu0 2
    %481 = vperm.xlu0 %480, %v43
    %v482 = vpop.permute.xlu0 %481
    %483 = vset.pattern.permute.xlu0 2
    %484 = vperm.xlu0 %483, %v44
    %v485 = vpop.permute.xlu0 %484
    %486 = vset.pattern.permute.xlu0 2
    %487 = vperm.xlu0 %486, %v45
    %v488 = vpop.permute.xlu0 %487
    %489 = vset.pattern.permute.xlu0 2
    %490 = vperm.xlu0 %489, %v46
    %v491 = vpop.permute.xlu0 %490
    %492 = vset.pattern.permute.xlu0 2
    %493 = vperm.xlu0 %492, %v47
    %v494 = vpop.permute.xlu0 %493
    %495 = vset.pattern.permute.xlu0 2
    %496 = vperm.xlu0 %495, %v48
    %v497 = vpop.permute.xlu0 %496
    %498 = vset.pattern.permute.xlu0 2
    %499 = vperm.xlu0 %498, %v49
    %v500 = vpop.permute.xlu0 %499
    %501 = vset.pattern.permute.xlu0 2
    %502 = vperm.xlu0 %501, %v50
    %v503 = vpop.permute.xlu0 %502
    %504 = vset.pattern.permute.xlu0 2
    %505 = vperm.xlu0 %504, %v51
    %v506 = vpop.permute.xlu0 %505
    %507 = vset.pattern.permute.xlu0 2
    %508 = vperm.xlu0 %507, %v52
    %v509 = vpop.permute.xlu0 %508
    %510 = vset.pattern.permute.xlu0 2
    %511 = vperm.xlu0 %510, %v53
    %v512 = vpop.permute.xlu0 %511
    %513 = vset.pattern.permute.xlu0 2
    %514 = vperm.xlu0 %513, %v54
    %v515 = vpop.permute.xlu0 %514
    %516 = vset.pattern.permute.xlu0 2
    %517 = vperm.xlu0 %516, %v55
    %v518 = vpop.permute.xlu0 %517
    %519 = vset.pattern.permute.xlu0 2
    %520 = vperm.xlu0 %519, %v56
    %v521 = vpop.permute.xlu0 %520
    %522 = vset.pattern.permute.xlu0 2
    %523 = vperm.xlu0 %522, %v57
    %v524 = vpop.permute.xlu0 %523
    %525 = vset.pattern.permute.xlu0 2
    %526 = vperm.xlu0 %525, %v58
    %v527 = vpop.permute.xlu0 %526
    %528 = vset.pattern.permute.xlu0 2
    %529 = vperm.xlu0 %528, %v59
    %v530 = vpop.permute.xlu0 %529
    %531 = vset.pattern.permute.xlu0 2
    %532 = vperm.xlu0 %531, %v60
    %v533 = vpop.permute.xlu0 %532
    %534 = vset.pattern.permute.xlu0 2
    %535 = vperm.xlu0 %534, %v61
    %v536 = vpop.permute.xlu0 %535
    %537 = vset.pattern.permute.xlu0 2
    %538 = vperm.xlu0 %537, %v62
    %v539 = vpop.permute.xlu0 %538
    %540 = vset.pattern.permute.xlu0 2
    %541 = vperm.xlu0 %540, %v63
    %v542 = vpop.permute.xlu0 %541
    %543 = vset.pattern.permute.xlu0 2
    %544 = vperm.xlu0 %543, %v64
    %v545 = vpop.permute.xlu0 %544
    %546 = vset.pattern.permute.xlu0 2
    %547 = vperm.xlu0 %546, %v65
    %v548 = vpop.permute.xlu0 %547
    %vm549 = vcmp.eq.s32.totalorder %v455, %v67
    %vm550 = vcmp.eq.s32.totalorder %v455, %v68
    %vm551 = vcmp.eq.s32.totalorder %v458, %v67
    %vm552 = vcmp.eq.s32.totalorder %v458, %v68
    %vm553 = vcmp.eq.s32.totalorder %v461, %v67
    %vm554 = vcmp.eq.s32.totalorder %v461, %v68
    %vm555 = vcmp.eq.s32.totalorder %v464, %v67
    %vm556 = vcmp.eq.s32.totalorder %v464, %v68
    %vm557 = vcmp.eq.s32.totalorder %v467, %v67
    %vm558 = vcmp.eq.s32.totalorder %v467, %v68
    %vm559 = vcmp.eq.s32.totalorder %v470, %v67
    %vm560 = vcmp.eq.s32.totalorder %v470, %v68
    %vm561 = vcmp.eq.s32.totalorder %v473, %v67
    %vm562 = vcmp.eq.s32.totalorder %v473, %v68
    %vm563 = vcmp.eq.s32.totalorder %v476, %v67
    %vm564 = vcmp.eq.s32.totalorder %v476, %v68
    %vm565 = vcmp.eq.s32.totalorder %v479, %v67
    %vm566 = vcmp.eq.s32.totalorder %v479, %v68
    %vm567 = vcmp.eq.s32.totalorder %v482, %v67
    %vm568 = vcmp.eq.s32.totalorder %v482, %v68
    %vm569 = vcmp.eq.s32.totalorder %v485, %v67
    %vm570 = vcmp.eq.s32.totalorder %v485, %v68
    %vm571 = vcmp.eq.s32.totalorder %v488, %v67
    %vm572 = vcmp.eq.s32.totalorder %v488, %v68
    %vm573 = vcmp.eq.s32.totalorder %v491, %v67
    %vm574 = vcmp.eq.s32.totalorder %v491, %v68
    %vm575 = vcmp.eq.s32.totalorder %v494, %v67
    %vm576 = vcmp.eq.s32.totalorder %v494, %v68
    %vm577 = vcmp.eq.s32.totalorder %v497, %v67
    %vm578 = vcmp.eq.s32.totalorder %v497, %v68
    %vm579 = vcmp.eq.s32.totalorder %v500, %v67
    %vm580 = vcmp.eq.s32.totalorder %v500, %v68
    %vm581 = vcmp.eq.s32.totalorder %v503, %v67
    %vm582 = vcmp.eq.s32.totalorder %v503, %v68
    %vm583 = vcmp.eq.s32.totalorder %v506, %v67
    %vm584 = vcmp.eq.s32.totalorder %v506, %v68
    %vm585 = vcmp.eq.s32.totalorder %v509, %v67
    %vm586 = vcmp.eq.s32.totalorder %v509, %v68
    %vm587 = vcmp.eq.s32.totalorder %v512, %v67
    %vm588 = vcmp.eq.s32.totalorder %v512, %v68
    %vm589 = vcmp.eq.s32.totalorder %v515, %v67
    %vm590 = vcmp.eq.s32.totalorder %v515, %v68
    %vm591 = vcmp.eq.s32.totalorder %v518, %v67
    %vm592 = vcmp.eq.s32.totalorder %v518, %v68
    %vm593 = vcmp.eq.s32.totalorder %v521, %v67
    %vm594 = vcmp.eq.s32.totalorder %v521, %v68
    %vm595 = vcmp.eq.s32.totalorder %v524, %v67
    %vm596 = vcmp.eq.s32.totalorder %v524, %v68
    %vm597 = vcmp.eq.s32.totalorder %v527, %v67
    %vm598 = vcmp.eq.s32.totalorder %v527, %v68
    %vm599 = vcmp.eq.s32.totalorder %v530, %v67
    %vm600 = vcmp.eq.s32.totalorder %v530, %v68
    %vm601 = vcmp.eq.s32.totalorder %v533, %v67
    %vm602 = vcmp.eq.s32.totalorder %v533, %v68
    %vm603 = vcmp.eq.s32.totalorder %v536, %v67
    %vm604 = vcmp.eq.s32.totalorder %v536, %v68
    %vm605 = vcmp.eq.s32.totalorder %v539, %v67
    %vm606 = vcmp.eq.s32.totalorder %v539, %v68
    %vm607 = vcmp.eq.s32.totalorder %v542, %v67
    %vm608 = vcmp.eq.s32.totalorder %v542, %v68
    %vm609 = vcmp.eq.s32.totalorder %v545, %v67
    %vm610 = vcmp.eq.s32.totalorder %v545, %v68
    %vm611 = vcmp.eq.s32.totalorder %v548, %v67
    %vm612 = vcmp.eq.s32.totalorder %v548, %v68
    %vm613 = vmor %vm389, %vm549
    %vm614 = vmor %vm390, %vm550
    %vm615 = vmor %vm391, %vm551
    %vm616 = vmor %vm392, %vm552
    %vm617 = vmor %vm393, %vm553
    %vm618 = vmor %vm394, %vm554
    %vm619 = vmor %vm395, %vm555
    %vm620 = vmor %vm396, %vm556
    %vm621 = vmor %vm397, %vm557
    %vm622 = vmor %vm398, %vm558
    %vm623 = vmor %vm399, %vm559
    %vm624 = vmor %vm400, %vm560
    %vm625 = vmor %vm401, %vm561
    %vm626 = vmor %vm402, %vm562
    %vm627 = vmor %vm403, %vm563
    %vm628 = vmor %vm404, %vm564
    %vm629 = vmor %vm405, %vm565
    %vm630 = vmor %vm406, %vm566
    %vm631 = vmor %vm407, %vm567
    %vm632 = vmor %vm408, %vm568
    %vm633 = vmor %vm409, %vm569
    %vm634 = vmor %vm410, %vm570
    %vm635 = vmor %vm411, %vm571
    %vm636 = vmor %vm412, %vm572
    %vm637 = vmor %vm413, %vm573
    %vm638 = vmor %vm414, %vm574
    %vm639 = vmor %vm415, %vm575
    %vm640 = vmor %vm416, %vm576
    %vm641 = vmor %vm417, %vm577
    %vm642 = vmor %vm418, %vm578
    %vm643 = vmor %vm419, %vm579
    %vm644 = vmor %vm420, %vm580
    %vm645 = vmor %vm421, %vm581
    %vm646 = vmor %vm422, %vm582
    %vm647 = vmor %vm423, %vm583
    %vm648 = vmor %vm424, %vm584
    %vm649 = vmor %vm425, %vm585
    %vm650 = vmor %vm426, %vm586
    %vm651 = vmor %vm427, %vm587
    %vm652 = vmor %vm428, %vm588
    %vm653 = vmor %vm429, %vm589
    %vm654 = vmor %vm430, %vm590
    %vm655 = vmor %vm431, %vm591
    %vm656 = vmor %vm432, %vm592
    %vm657 = vmor %vm433, %vm593
    %vm658 = vmor %vm434, %vm594
    %vm659 = vmor %vm435, %vm595
    %vm660 = vmor %vm436, %vm596
    %vm661 = vmor %vm437, %vm597
    %vm662 = vmor %vm438, %vm598
    %vm663 = vmor %vm439, %vm599
    %vm664 = vmor %vm440, %vm600
    %vm665 = vmor %vm441, %vm601
    %vm666 = vmor %vm442, %vm602
    %vm667 = vmor %vm443, %vm603
    %vm668 = vmor %vm444, %vm604
    %vm669 = vmor %vm445, %vm605
    %vm670 = vmor %vm446, %vm606
    %vm671 = vmor %vm447, %vm607
    %vm672 = vmor %vm448, %vm608
    %vm673 = vmor %vm449, %vm609
    %vm674 = vmor %vm450, %vm610
    %vm675 = vmor %vm451, %vm611
    %vm676 = vmor %vm452, %vm612
    %677 = vset.pattern.permute.xlu0 3
    %678 = vperm.xlu0 %677, %v34
    %v679 = vpop.permute.xlu0 %678
    %680 = vset.pattern.permute.xlu0 3
    %681 = vperm.xlu0 %680, %v35
    %v682 = vpop.permute.xlu0 %681
    %683 = vset.pattern.permute.xlu0 3
    %684 = vperm.xlu0 %683, %v36
    %v685 = vpop.permute.xlu0 %684
    %686 = vset.pattern.permute.xlu0 3
    %687 = vperm.xlu0 %686, %v37
    %v688 = vpop.permute.xlu0 %687
    %689 = vset.pattern.permute.xlu0 3
    %690 = vperm.xlu0 %689, %v38
    %v691 = vpop.permute.xlu0 %690
    %692 = vset.pattern.permute.xlu0 3
    %693 = vperm.xlu0 %692, %v39
    %v694 = vpop.permute.xlu0 %693
    %695 = vset.pattern.permute.xlu0 3
    %696 = vperm.xlu0 %695, %v40
    %v697 = vpop.permute.xlu0 %696
    %698 = vset.pattern.permute.xlu0 3
    %699 = vperm.xlu0 %698, %v41
    %v700 = vpop.permute.xlu0 %699
    %701 = vset.pattern.permute.xlu0 3
    %702 = vperm.xlu0 %701, %v42
    %v703 = vpop.permute.xlu0 %702
    %704 = vset.pattern.permute.xlu0 3
    %705 = vperm.xlu0 %704, %v43
    %v706 = vpop.permute.xlu0 %705
    %707 = vset.pattern.permute.xlu0 3
    %708 = vperm.xlu0 %707, %v44
    %v709 = vpop.permute.xlu0 %708
    %710 = vset.pattern.permute.xlu0 3
    %711 = vperm.xlu0 %710, %v45
    %v712 = vpop.permute.xlu0 %711
    %713 = vset.pattern.permute.xlu0 3
    %714 = vperm.xlu0 %713, %v46
    %v715 = vpop.permute.xlu0 %714
    %716 = vset.pattern.permute.xlu0 3
    %717 = vperm.xlu0 %716, %v47
    %v718 = vpop.permute.xlu0 %717
    %719 = vset.pattern.permute.xlu0 3
    %720 = vperm.xlu0 %719, %v48
    %v721 = vpop.permute.xlu0 %720
    %722 = vset.pattern.permute.xlu0 3
    %723 = vperm.xlu0 %722, %v49
    %v724 = vpop.permute.xlu0 %723
    %725 = vset.pattern.permute.xlu0 3
    %726 = vperm.xlu0 %725, %v50
    %v727 = vpop.permute.xlu0 %726
    %728 = vset.pattern.permute.xlu0 3
    %729 = vperm.xlu0 %728, %v51
    %v730 = vpop.permute.xlu0 %729
    %731 = vset.pattern.permute.xlu0 3
    %732 = vperm.xlu0 %731, %v52
    %v733 = vpop.permute.xlu0 %732
    %734 = vset.pattern.permute.xlu0 3
    %735 = vperm.xlu0 %734, %v53
    %v736 = vpop.permute.xlu0 %735
    %737 = vset.pattern.permute.xlu0 3
    %738 = vperm.xlu0 %737, %v54
    %v739 = vpop.permute.xlu0 %738
    %740 = vset.pattern.permute.xlu0 3
    %741 = vperm.xlu0 %740, %v55
    %v742 = vpop.permute.xlu0 %741
    %743 = vset.pattern.permute.xlu0 3
    %744 = vperm.xlu0 %743, %v56
    %v745 = vpop.permute.xlu0 %744
    %746 = vset.pattern.permute.xlu0 3
    %747 = vperm.xlu0 %746, %v57
    %v748 = vpop.permute.xlu0 %747
    %749 = vset.pattern.permute.xlu0 3
    %750 = vperm.xlu0 %749, %v58
    %v751 = vpop.permute.xlu0 %750
    %752 = vset.pattern.permute.xlu0 3
    %753 = vperm.xlu0 %752, %v59
    %v754 = vpop.permute.xlu0 %753
    %755 = vset.pattern.permute.xlu0 3
    %756 = vperm.xlu0 %755, %v60
    %v757 = vpop.permute.xlu0 %756
    %758 = vset.pattern.permute.xlu0 3
    %759 = vperm.xlu0 %758, %v61
    %v760 = vpop.permute.xlu0 %759
    %761 = vset.pattern.permute.xlu0 3
    %762 = vperm.xlu0 %761, %v62
    %v763 = vpop.permute.xlu0 %762
    %764 = vset.pattern.permute.xlu0 3
    %765 = vperm.xlu0 %764, %v63
    %v766 = vpop.permute.xlu0 %765
    %767 = vset.pattern.permute.xlu0 3
    %768 = vperm.xlu0 %767, %v64
    %v769 = vpop.permute.xlu0 %768
    %770 = vset.pattern.permute.xlu0 3
    %771 = vperm.xlu0 %770, %v65
    %v772 = vpop.permute.xlu0 %771
    %vm773 = vcmp.eq.s32.totalorder %v679, %v67
    %vm774 = vcmp.eq.s32.totalorder %v679, %v68
    %vm775 = vcmp.eq.s32.totalorder %v682, %v67
    %vm776 = vcmp.eq.s32.totalorder %v682, %v68
    %vm777 = vcmp.eq.s32.totalorder %v685, %v67
    %vm778 = vcmp.eq.s32.totalorder %v685, %v68
    %vm779 = vcmp.eq.s32.totalorder %v688, %v67
    %vm780 = vcmp.eq.s32.totalorder %v688, %v68
    %vm781 = vcmp.eq.s32.totalorder %v691, %v67
    %vm782 = vcmp.eq.s32.totalorder %v691, %v68
    %vm783 = vcmp.eq.s32.totalorder %v694, %v67
    %vm784 = vcmp.eq.s32.totalorder %v694, %v68
    %vm785 = vcmp.eq.s32.totalorder %v697, %v67
    %vm786 = vcmp.eq.s32.totalorder %v697, %v68
    %vm787 = vcmp.eq.s32.totalorder %v700, %v67
    %vm788 = vcmp.eq.s32.totalorder %v700, %v68
    %vm789 = vcmp.eq.s32.totalorder %v703, %v67
    %vm790 = vcmp.eq.s32.totalorder %v703, %v68
    %vm791 = vcmp.eq.s32.totalorder %v706, %v67
    %vm792 = vcmp.eq.s32.totalorder %v706, %v68
    %vm793 = vcmp.eq.s32.totalorder %v709, %v67
    %vm794 = vcmp.eq.s32.totalorder %v709, %v68
    %vm795 = vcmp.eq.s32.totalorder %v712, %v67
    %vm796 = vcmp.eq.s32.totalorder %v712, %v68
    %vm797 = vcmp.eq.s32.totalorder %v715, %v67
    %vm798 = vcmp.eq.s32.totalorder %v715, %v68
    %vm799 = vcmp.eq.s32.totalorder %v718, %v67
    %vm800 = vcmp.eq.s32.totalorder %v718, %v68
    %vm801 = vcmp.eq.s32.totalorder %v721, %v67
    %vm802 = vcmp.eq.s32.totalorder %v721, %v68
    %vm803 = vcmp.eq.s32.totalorder %v724, %v67
    %vm804 = vcmp.eq.s32.totalorder %v724, %v68
    %vm805 = vcmp.eq.s32.totalorder %v727, %v67
    %vm806 = vcmp.eq.s32.totalorder %v727, %v68
    %vm807 = vcmp.eq.s32.totalorder %v730, %v67
    %vm808 = vcmp.eq.s32.totalorder %v730, %v68
    %vm809 = vcmp.eq.s32.totalorder %v733, %v67
    %vm810 = vcmp.eq.s32.totalorder %v733, %v68
    %vm811 = vcmp.eq.s32.totalorder %v736, %v67
    %vm812 = vcmp.eq.s32.totalorder %v736, %v68
    %vm813 = vcmp.eq.s32.totalorder %v739, %v67
    %vm814 = vcmp.eq.s32.totalorder %v739, %v68
    %vm815 = vcmp.eq.s32.totalorder %v742, %v67
    %vm816 = vcmp.eq.s32.totalorder %v742, %v68
    %vm817 = vcmp.eq.s32.totalorder %v745, %v67
    %vm818 = vcmp.eq.s32.totalorder %v745, %v68
    %vm819 = vcmp.eq.s32.totalorder %v748, %v67
    %vm820 = vcmp.eq.s32.totalorder %v748, %v68
    %vm821 = vcmp.eq.s32.totalorder %v751, %v67
    %vm822 = vcmp.eq.s32.totalorder %v751, %v68
    %vm823 = vcmp.eq.s32.totalorder %v754, %v67
    %vm824 = vcmp.eq.s32.totalorder %v754, %v68
    %vm825 = vcmp.eq.s32.totalorder %v757, %v67
    %vm826 = vcmp.eq.s32.totalorder %v757, %v68
    %vm827 = vcmp.eq.s32.totalorder %v760, %v67
    %vm828 = vcmp.eq.s32.totalorder %v760, %v68
    %vm829 = vcmp.eq.s32.totalorder %v763, %v67
    %vm830 = vcmp.eq.s32.totalorder %v763, %v68
    %vm831 = vcmp.eq.s32.totalorder %v766, %v67
    %vm832 = vcmp.eq.s32.totalorder %v766, %v68
    %vm833 = vcmp.eq.s32.totalorder %v769, %v67
    %vm834 = vcmp.eq.s32.totalorder %v769, %v68
    %vm835 = vcmp.eq.s32.totalorder %v772, %v67
    %vm836 = vcmp.eq.s32.totalorder %v772, %v68
    %vm837 = vmor %vm613, %vm773
    %vm838 = vmor %vm614, %vm774
    %vm839 = vmor %vm615, %vm775
    %vm840 = vmor %vm616, %vm776
    %vm841 = vmor %vm617, %vm777
    %vm842 = vmor %vm618, %vm778
    %vm843 = vmor %vm619, %vm779
    %vm844 = vmor %vm620, %vm780
    %vm845 = vmor %vm621, %vm781
    %vm846 = vmor %vm622, %vm782
    %vm847 = vmor %vm623, %vm783
    %vm848 = vmor %vm624, %vm784
    %vm849 = vmor %vm625, %vm785
    %vm850 = vmor %vm626, %vm786
    %vm851 = vmor %vm627, %vm787
    %vm852 = vmor %vm628, %vm788
    %vm853 = vmor %vm629, %vm789
    %vm854 = vmor %vm630, %vm790
    %vm855 = vmor %vm631, %vm791
    %vm856 = vmor %vm632, %vm792
    %vm857 = vmor %vm633, %vm793
    %vm858 = vmor %vm634, %vm794
    %vm859 = vmor %vm635, %vm795
    %vm860 = vmor %vm636, %vm796
    %vm861 = vmor %vm637, %vm797
    %vm862 = vmor %vm638, %vm798
    %vm863 = vmor %vm639, %vm799
    %vm864 = vmor %vm640, %vm800
    %vm865 = vmor %vm641, %vm801
    %vm866 = vmor %vm642, %vm802
    %vm867 = vmor %vm643, %vm803
    %vm868 = vmor %vm644, %vm804
    %vm869 = vmor %vm645, %vm805
    %vm870 = vmor %vm646, %vm806
    %vm871 = vmor %vm647, %vm807
    %vm872 = vmor %vm648, %vm808
    %vm873 = vmor %vm649, %vm809
    %vm874 = vmor %vm650, %vm810
    %vm875 = vmor %vm651, %vm811
    %vm876 = vmor %vm652, %vm812
    %vm877 = vmor %vm653, %vm813
    %vm878 = vmor %vm654, %vm814
    %vm879 = vmor %vm655, %vm815
    %vm880 = vmor %vm656, %vm816
    %vm881 = vmor %vm657, %vm817
    %vm882 = vmor %vm658, %vm818
    %vm883 = vmor %vm659, %vm819
    %vm884 = vmor %vm660, %vm820
    %vm885 = vmor %vm661, %vm821
    %vm886 = vmor %vm662, %vm822
    %vm887 = vmor %vm663, %vm823
    %vm888 = vmor %vm664, %vm824
    %vm889 = vmor %vm665, %vm825
    %vm890 = vmor %vm666, %vm826
    %vm891 = vmor %vm667, %vm827
    %vm892 = vmor %vm668, %vm828
    %vm893 = vmor %vm669, %vm829
    %vm894 = vmor %vm670, %vm830
    %vm895 = vmor %vm671, %vm831
    %vm896 = vmor %vm672, %vm832
    %vm897 = vmor %vm673, %vm833
    %vm898 = vmor %vm674, %vm834
    %vm899 = vmor %vm675, %vm835
    %vm900 = vmor %vm676, %vm836
    %v901 = vsel %vm837, 1, 0
    %v902 = vsel %vm838, 1, 0
    %v903 = vsel %vm839, 1, 0
    %v904 = vsel %vm840, 1, 0
    %v905 = vsel %vm841, 1, 0
    %v906 = vsel %vm842, 1, 0
    %v907 = vsel %vm843, 1, 0
    %v908 = vsel %vm844, 1, 0
    %v909 = vsel %vm845, 1, 0
    %v910 = vsel %vm846, 1, 0
    %v911 = vsel %vm847, 1, 0
    %v912 = vsel %vm848, 1, 0
    %v913 = vsel %vm849, 1, 0
    %v914 = vsel %vm850, 1, 0
    %v915 = vsel %vm851, 1, 0
    %v916 = vsel %vm852, 1, 0
    %v917 = vsel %vm853, 1, 0
    %v918 = vsel %vm854, 1, 0
    %v919 = vsel %vm855, 1, 0
    %v920 = vsel %vm856, 1, 0
    %v921 = vsel %vm857, 1, 0
    %v922 = vsel %vm858, 1, 0
    %v923 = vsel %vm859, 1, 0
    %v924 = vsel %vm860, 1, 0
    %v925 = vsel %vm861, 1, 0
    %v926 = vsel %vm862, 1, 0
    %v927 = vsel %vm863, 1, 0
    %v928 = vsel %vm864, 1, 0
    %v929 = vsel %vm865, 1, 0
    %v930 = vsel %vm866, 1, 0
    %v931 = vsel %vm867, 1, 0
    %v932 = vsel %vm868, 1, 0
    %v933 = vsel %vm869, 1, 0
    %v934 = vsel %vm870, 1, 0
    %v935 = vsel %vm871, 1, 0
    %v936 = vsel %vm872, 1, 0
    %v937 = vsel %vm873, 1, 0
    %v938 = vsel %vm874, 1, 0
    %v939 = vsel %vm875, 1, 0
    %v940 = vsel %vm876, 1, 0
    %v941 = vsel %vm877, 1, 0
    %v942 = vsel %vm878, 1, 0
    %v943 = vsel %vm879, 1, 0
    %v944 = vsel %vm880, 1, 0
    %v945 = vsel %vm881, 1, 0
    %v946 = vsel %vm882, 1, 0
    %v947 = vsel %vm883, 1, 0
    %v948 = vsel %vm884, 1, 0
    %v949 = vsel %vm885, 1, 0
    %v950 = vsel %vm886, 1, 0
    %v951 = vsel %vm887, 1, 0
    %v952 = vsel %vm888, 1, 0
    %v953 = vsel %vm889, 1, 0
    %v954 = vsel %vm890, 1, 0
    %v955 = vsel %vm891, 1, 0
    %v956 = vsel %vm892, 1, 0
    %v957 = vsel %vm893, 1, 0
    %v958 = vsel %vm894, 1, 0
    %v959 = vsel %vm895, 1, 0
    %v960 = vsel %vm896, 1, 0
    %v961 = vsel %vm897, 1, 0
    %v962 = vsel %vm898, 1, 0
    %v963 = vsel %vm899, 1, 0
    %v964 = vsel %vm900, 1, 0
    %v965 = vcvt.s32.f32 %v901
    %v966 = vcvt.s32.f32 %v902
    %v967 = vcvt.s32.f32 %v903
    %v968 = vcvt.s32.f32 %v904
    %v969 = vcvt.s32.f32 %v905
    %v970 = vcvt.s32.f32 %v906
    %v971 = vcvt.s32.f32 %v907
    %v972 = vcvt.s32.f32 %v908
    %v973 = vcvt.s32.f32 %v909
    %v974 = vcvt.s32.f32 %v910
    %v975 = vcvt.s32.f32 %v911
    %v976 = vcvt.s32.f32 %v912
    %v977 = vcvt.s32.f32 %v913
    %v978 = vcvt.s32.f32 %v914
    %v979 = vcvt.s32.f32 %v915
    %v980 = vcvt.s32.f32 %v916
    %v981 = vcvt.s32.f32 %v917
    %v982 = vcvt.s32.f32 %v918
    %v983 = vcvt.s32.f32 %v919
    %v984 = vcvt.s32.f32 %v920
    %v985 = vcvt.s32.f32 %v921
    %v986 = vcvt.s32.f32 %v922
    %v987 = vcvt.s32.f32 %v923
    %v988 = vcvt.s32.f32 %v924
    %v989 = vcvt.s32.f32 %v925
    %v990 = vcvt.s32.f32 %v926
    %v991 = vcvt.s32.f32 %v927
    %v992 = vcvt.s32.f32 %v928
    %v993 = vcvt.s32.f32 %v929
    %v994 = vcvt.s32.f32 %v930
    %v995 = vcvt.s32.f32 %v931
    %v996 = vcvt.s32.f32 %v932
    %v997 = vcvt.s32.f32 %v933
    %v998 = vcvt.s32.f32 %v934
    %v999 = vcvt.s32.f32 %v935
    %v1000 = vcvt.s32.f32 %v936
    %v1001 = vcvt.s32.f32 %v937
    %v1002 = vcvt.s32.f32 %v938
    %v1003 = vcvt.s32.f32 %v939
    %v1004 = vcvt.s32.f32 %v940
    %v1005 = vcvt.s32.f32 %v941
    %v1006 = vcvt.s32.f32 %v942
    %v1007 = vcvt.s32.f32 %v943
    %v1008 = vcvt.s32.f32 %v944
    %v1009 = vcvt.s32.f32 %v945
    %v1010 = vcvt.s32.f32 %v946
    %v1011 = vcvt.s32.f32 %v947
    %v1012 = vcvt.s32.f32 %v948
    %v1013 = vcvt.s32.f32 %v949
    %v1014 = vcvt.s32.f32 %v950
    %v1015 = vcvt.s32.f32 %v951
    %v1016 = vcvt.s32.f32 %v952
    %v1017 = vcvt.s32.f32 %v953
    %v1018 = vcvt.s32.f32 %v954
    %v1019 = vcvt.s32.f32 %v955
    %v1020 = vcvt.s32.f32 %v956
    %v1021 = vcvt.s32.f32 %v957
    %v1022 = vcvt.s32.f32 %v958
    %v1023 = vcvt.s32.f32 %v959
    %v1024 = vcvt.s32.f32 %v960
    %v1025 = vcvt.s32.f32 %v961
    %v1026 = vcvt.s32.f32 %v962
    %v1027 = vcvt.s32.f32 %v963
    %v1028 = vcvt.s32.f32 %v964
    %v1029 = vpack.c.bf16 %v967, %v965
    %v1030 = vpack.c.bf16 %v968, %v966
    %v1031 = vpack.c.bf16 %v971, %v969
    %v1032 = vpack.c.bf16 %v972, %v970
    %v1033 = vpack.c.bf16 %v975, %v973
    %v1034 = vpack.c.bf16 %v976, %v974
    %v1035 = vpack.c.bf16 %v979, %v977
    %v1036 = vpack.c.bf16 %v980, %v978
    %v1037 = vpack.c.bf16 %v983, %v981
    %v1038 = vpack.c.bf16 %v984, %v982
    %v1039 = vpack.c.bf16 %v987, %v985
    %v1040 = vpack.c.bf16 %v988, %v986
    %v1041 = vpack.c.bf16 %v991, %v989
    %v1042 = vpack.c.bf16 %v992, %v990
    %v1043 = vpack.c.bf16 %v995, %v993
    %v1044 = vpack.c.bf16 %v996, %v994
    %v1045 = vpack.c.bf16 %v999, %v997
    %v1046 = vpack.c.bf16 %v1000, %v998
    %v1047 = vpack.c.bf16 %v1003, %v1001
    %v1048 = vpack.c.bf16 %v1004, %v1002
    %v1049 = vpack.c.bf16 %v1007, %v1005
    %v1050 = vpack.c.bf16 %v1008, %v1006
    %v1051 = vpack.c.bf16 %v1011, %v1009
    %v1052 = vpack.c.bf16 %v1012, %v1010
    %v1053 = vpack.c.bf16 %v1015, %v1013
    %v1054 = vpack.c.bf16 %v1016, %v1014
    %v1055 = vpack.c.bf16 %v1019, %v1017
    %v1056 = vpack.c.bf16 %v1020, %v1018
    %v1057 = vpack.c.bf16 %v1023, %v1021
    %v1058 = vpack.c.bf16 %v1024, %v1022
    %v1059 = vpack.c.bf16 %v1027, %v1025
    %v1060 = vpack.c.bf16 %v1028, %v1026
    %v1061 = vld [vmem:[%s1] sm:$0xf]
    %v1062 = vld [vmem:[%s1 + $0x4] sm:$0xf]
    %v1063 = vld [vmem:[%s1 + $0x8] sm:$0xf]
    %v1064 = vld [vmem:[%s1 + $0xc] sm:$0xf]
    %v1065 = vld [vmem:[%s1 + $0x10] sm:$0xf]
    %v1066 = vld [vmem:[%s1 + $0x14] sm:$0xf]
    %v1067 = vld [vmem:[%s1 + $0x18] sm:$0xf]
    %v1068 = vld [vmem:[%s1 + $0x1c] sm:$0xf]
    %v1069 = vld [vmem:[%s1 + $0x20] sm:$0xf]
    %v1070 = vld [vmem:[%s1 + $0x24] sm:$0xf]
    %v1071 = vld [vmem:[%s1 + $0x28] sm:$0xf]
    %v1072 = vld [vmem:[%s1 + $0x2c] sm:$0xf]
    %v1073 = vld [vmem:[%s1 + $0x30] sm:$0xf]
    %v1074 = vld [vmem:[%s1 + $0x34] sm:$0xf]
    %v1075 = vld [vmem:[%s1 + $0x38] sm:$0xf]
    %v1076 = vld [vmem:[%s1 + $0x3c] sm:$0xf]
    %v1077 = vld [vmem:[%s1 + $0x40] sm:$0xf]
    %v1078 = vld [vmem:[%s1 + $0x44] sm:$0xf]
    %v1079 = vld [vmem:[%s1 + $0x48] sm:$0xf]
    %v1080 = vld [vmem:[%s1 + $0x4c] sm:$0xf]
    %v1081 = vld [vmem:[%s1 + $0x50] sm:$0xf]
    %v1082 = vld [vmem:[%s1 + $0x54] sm:$0xf]
    %v1083 = vld [vmem:[%s1 + $0x58] sm:$0xf]
    %v1084 = vld [vmem:[%s1 + $0x5c] sm:$0xf]
    %v1085 = vld [vmem:[%s1 + $0x60] sm:$0xf]
    %v1086 = vld [vmem:[%s1 + $0x64] sm:$0xf]
    %v1087 = vld [vmem:[%s1 + $0x68] sm:$0xf]
    %v1088 = vld [vmem:[%s1 + $0x6c] sm:$0xf]
    %v1089 = vld [vmem:[%s1 + $0x70] sm:$0xf]
    %v1090 = vld [vmem:[%s1 + $0x74] sm:$0xf]
    %v1091 = vld [vmem:[%s1 + $0x78] sm:$0xf]
    %v1092 = vld [vmem:[%s1 + $0x7c] sm:$0xf]
    %v1093 = vld [vmem:[%s2] sm:$0xf]
    %v1094 = vld [vmem:[%s2 + $0x4] sm:$0xf]
    %v1095 = vld [vmem:[%s2 + $0x8] sm:$0xf]
    %v1096 = vld [vmem:[%s2 + $0xc] sm:$0xf]
    %v1097 = vld [vmem:[%s2 + $0x10] sm:$0xf]
    %v1098 = vld [vmem:[%s2 + $0x14] sm:$0xf]
    %v1099 = vld [vmem:[%s2 + $0x18] sm:$0xf]
    %v1100 = vld [vmem:[%s2 + $0x1c] sm:$0xf]
    %v1101 = vld [vmem:[%s2 + $0x20] sm:$0xf]
    %v1102 = vld [vmem:[%s2 + $0x24] sm:$0xf]
    %v1103 = vld [vmem:[%s2 + $0x28] sm:$0xf]
    %v1104 = vld [vmem:[%s2 + $0x2c] sm:$0xf]
    %v1105 = vld [vmem:[%s2 + $0x30] sm:$0xf]
    %v1106 = vld [vmem:[%s2 + $0x34] sm:$0xf]
    %v1107 = vld [vmem:[%s2 + $0x38] sm:$0xf]
    %v1108 = vld [vmem:[%s2 + $0x3c] sm:$0xf]
    %v1109 = vld [vmem:[%s2 + $0x40] sm:$0xf]
    %v1110 = vld [vmem:[%s2 + $0x44] sm:$0xf]
    %v1111 = vld [vmem:[%s2 + $0x48] sm:$0xf]
    %v1112 = vld [vmem:[%s2 + $0x4c] sm:$0xf]
    %v1113 = vld [vmem:[%s2 + $0x50] sm:$0xf]
    %v1114 = vld [vmem:[%s2 + $0x54] sm:$0xf]
    %v1115 = vld [vmem:[%s2 + $0x58] sm:$0xf]
    %v1116 = vld [vmem:[%s2 + $0x5c] sm:$0xf]
    %v1117 = vld [vmem:[%s2 + $0x60] sm:$0xf]
    %v1118 = vld [vmem:[%s2 + $0x64] sm:$0xf]
    %v1119 = vld [vmem:[%s2 + $0x68] sm:$0xf]
    %v1120 = vld [vmem:[%s2 + $0x6c] sm:$0xf]
    %v1121 = vld [vmem:[%s2 + $0x70] sm:$0xf]
    %v1122 = vld [vmem:[%s2 + $0x74] sm:$0xf]
    %v1123 = vld [vmem:[%s2 + $0x78] sm:$0xf]
    %v1124 = vld [vmem:[%s2 + $0x7c] sm:$0xf]
    %v1157 = vunpack.c.l.b16 %v1093
    %v1158 = vunpack.c.l.b16 %v1094
    %v1159 = vunpack.c.l.b16 %v1095
    %v1160 = vunpack.c.l.b16 %v1096
    %v1161 = vunpack.c.l.b16 %v1097
    %v1162 = vunpack.c.l.b16 %v1098
    %v1163 = vunpack.c.l.b16 %v1099
    %v1164 = vunpack.c.l.b16 %v1100
    %v1165 = vunpack.c.l.b16 %v1101
    %v1166 = vunpack.c.l.b16 %v1102
    %v1167 = vunpack.c.l.b16 %v1103
    %v1168 = vunpack.c.l.b16 %v1104
    %v1169 = vunpack.c.l.b16 %v1105
    %v1170 = vunpack.c.l.b16 %v1106
    %v1171 = vunpack.c.l.b16 %v1107
    %v1172 = vunpack.c.l.b16 %v1108
    %v1173 = vunpack.c.l.b16 %v1109
    %v1174 = vunpack.c.l.b16 %v1110
    %v1175 = vunpack.c.l.b16 %v1111
    %v1176 = vunpack.c.l.b16 %v1112
    %v1177 = vunpack.c.l.b16 %v1113
    %v1178 = vunpack.c.l.b16 %v1114
    %v1179 = vunpack.c.l.b16 %v1115
    %v1180 = vunpack.c.l.b16 %v1116
    %v1181 = vunpack.c.l.b16 %v1117
    %v1182 = vunpack.c.l.b16 %v1118
    %v1183 = vunpack.c.l.b16 %v1119
    %v1184 = vunpack.c.l.b16 %v1120
    %v1185 = vunpack.c.l.b16 %v1121
    %v1186 = vunpack.c.l.b16 %v1122
    %v1187 = vunpack.c.l.b16 %v1123
    %v1188 = vunpack.c.l.b16 %v1124
    %v1189 = vpack.c.b16 %v1158, %v1157
    %v1190 = vpack.c.b16 %v1160, %v1159
    %v1191 = vpack.c.b16 %v1162, %v1161
    %v1192 = vpack.c.b16 %v1164, %v1163
    %v1193 = vpack.c.b16 %v1166, %v1165
    %v1194 = vpack.c.b16 %v1168, %v1167
    %v1195 = vpack.c.b16 %v1170, %v1169
    %v1196 = vpack.c.b16 %v1172, %v1171
    %v1197 = vpack.c.b16 %v1174, %v1173
    %v1198 = vpack.c.b16 %v1176, %v1175
    %v1199 = vpack.c.b16 %v1178, %v1177
    %v1200 = vpack.c.b16 %v1180, %v1179
    %v1201 = vpack.c.b16 %v1182, %v1181
    %v1202 = vpack.c.b16 %v1184, %v1183
    %v1203 = vpack.c.b16 %v1186, %v1185
    %v1204 = vpack.c.b16 %v1188, %v1187
    %1221 = vmatpush.bf16.msra.mxu0 %v1196
    %1222 = vmatpush.bf16.msra.mxu0 %v1195
    %1223 = vmatpush.bf16.msra.mxu0 %v1194
    %1224 = vmatpush.bf16.msra.mxu0 %v1193
    %1225 = vmatpush.bf16.msra.mxu0 %v1192
    %1226 = vmatpush.bf16.msra.mxu0 %v1191
    %1227 = vmatpush.bf16.msra.mxu0 %v1190
    %1228 = vmatpush.bf16.msra.mxu0 %v1189
    %1229 = vmatmul.bf16.gmra.mxu0 %v1029
    %v1230 = vpop.f32.mrf.mxu0
    %v1231 = vadd.f32 0.0, %v1230
    %v1232 = vpop.f32.mrf.mxu0
    %v1233 = vadd.f32 0.0, %v1232
    %1234 = vmatmul.bf16.gmra.mxu0 %v1031
    %v1235 = vpop.f32.mrf.mxu0
    %v1236 = vadd.f32 0.0, %v1235
    %v1237 = vpop.f32.mrf.mxu0
    %v1238 = vadd.f32 0.0, %v1237
    %1239 = vmatmul.bf16.gmra.mxu0 %v1033
    %v1240 = vpop.f32.mrf.mxu0
    %v1241 = vadd.f32 0.0, %v1240
    %v1242 = vpop.f32.mrf.mxu0
    %v1243 = vadd.f32 0.0, %v1242
    %1244 = vmatmul.bf16.gmra.mxu0 %v1035
    %v1245 = vpop.f32.mrf.mxu0
    %v1246 = vadd.f32 0.0, %v1245
    %v1247 = vpop.f32.mrf.mxu0
    %v1248 = vadd.f32 0.0, %v1247
    %1249 = vmatmul.bf16.gmra.mxu0 %v1037
    %v1250 = vpop.f32.mrf.mxu0
    %v1251 = vadd.f32 0.0, %v1250
    %v1252 = vpop.f32.mrf.mxu0
    %v1253 = vadd.f32 0.0, %v1252
    %1254 = vmatmul.bf16.gmra.mxu0 %v1039
    %v1255 = vpop.f32.mrf.mxu0
    %v1256 = vadd.f32 0.0, %v1255
    %v1257 = vpop.f32.mrf.mxu0
    %v1258 = vadd.f32 0.0, %v1257
    %1259 = vmatmul.bf16.gmra.mxu0 %v1041
    %v1260 = vpop.f32.mrf.mxu0
    %v1261 = vadd.f32 0.0, %v1260
    %v1262 = vpop.f32.mrf.mxu0
    %v1263 = vadd.f32 0.0, %v1262
    %1264 = vmatmul.bf16.gmra.mxu0 %v1043
    %v1265 = vpop.f32.mrf.mxu0
    %v1266 = vadd.f32 0.0, %v1265
    %v1267 = vpop.f32.mrf.mxu0
    %v1268 = vadd.f32 0.0, %v1267
    %1269 = vmatmul.bf16.gmra.mxu0 %v1045
    %v1270 = vpop.f32.mrf.mxu0
    %v1271 = vadd.f32 0.0, %v1270
    %v1272 = vpop.f32.mrf.mxu0
    %v1273 = vadd.f32 0.0, %v1272
    %1274 = vmatmul.bf16.gmra.mxu0 %v1047
    %v1275 = vpop.f32.mrf.mxu0
    %v1276 = vadd.f32 0.0, %v1275
    %v1277 = vpop.f32.mrf.mxu0
    %v1278 = vadd.f32 0.0, %v1277
    %1279 = vmatmul.bf16.gmra.mxu0 %v1049
    %v1280 = vpop.f32.mrf.mxu0
    %v1281 = vadd.f32 0.0, %v1280
    %v1282 = vpop.f32.mrf.mxu0
    %v1283 = vadd.f32 0.0, %v1282
    %1284 = vmatmul.bf16.gmra.mxu0 %v1051
    %v1285 = vpop.f32.mrf.mxu0
    %v1286 = vadd.f32 0.0, %v1285
    %v1287 = vpop.f32.mrf.mxu0
    %v1288 = vadd.f32 0.0, %v1287
    %1289 = vmatmul.bf16.gmra.mxu0 %v1053
    %v1290 = vpop.f32.mrf.mxu0
    %v1291 = vadd.f32 0.0, %v1290
    %v1292 = vpop.f32.mrf.mxu0
    %v1293 = vadd.f32 0.0, %v1292
    %1294 = vmatmul.bf16.gmra.mxu0 %v1055
    %v1295 = vpop.f32.mrf.mxu0
    %v1296 = vadd.f32 0.0, %v1295
    %v1297 = vpop.f32.mrf.mxu0
    %v1298 = vadd.f32 0.0, %v1297
    %1299 = vmatmul.bf16.gmra.mxu0 %v1057
    %v1300 = vpop.f32.mrf.mxu0
    %v1301 = vadd.f32 0.0, %v1300
    %v1302 = vpop.f32.mrf.mxu0
    %v1303 = vadd.f32 0.0, %v1302
    %1304 = vmatmul.bf16.gmra.mxu0 %v1059
    %v1305 = vpop.f32.mrf.mxu0
    %v1306 = vadd.f32 0.0, %v1305
    %v1307 = vpop.f32.mrf.mxu0
    %v1308 = vadd.f32 0.0, %v1307
    %1309 = vdwg.mxu0
    %1310 = vmatpush.bf16.msra.mxu0 %v1204
    %1311 = vmatpush.bf16.msra.mxu0 %v1203
    %1312 = vmatpush.bf16.msra.mxu0 %v1202
    %1313 = vmatpush.bf16.msra.mxu0 %v1201
    %1314 = vmatpush.bf16.msra.mxu0 %v1200
    %1315 = vmatpush.bf16.msra.mxu0 %v1199
    %1316 = vmatpush.bf16.msra.mxu0 %v1198
    %1317 = vmatpush.bf16.msra.mxu0 %v1197
    %1318 = vmatmul.bf16.gmra.mxu0 %v1030
    %v1319 = vpop.f32.mrf.mxu0
    %v1320 = vadd.f32 %v1231, %v1319
    %v1321 = vpop.f32.mrf.mxu0
    %v1322 = vadd.f32 %v1233, %v1321
    %1323 = vmatmul.bf16.gmra.mxu0 %v1032
    %v1324 = vpop.f32.mrf.mxu0
    %v1325 = vadd.f32 %v1236, %v1324
    %v1326 = vpop.f32.mrf.mxu0
    %v1327 = vadd.f32 %v1238, %v1326
    %1328 = vmatmul.bf16.gmra.mxu0 %v1034
    %v1329 = vpop.f32.mrf.mxu0
    %v1330 = vadd.f32 %v1241, %v1329
    %v1331 = vpop.f32.mrf.mxu0
    %v1332 = vadd.f32 %v1243, %v1331
    %1333 = vmatmul.bf16.gmra.mxu0 %v1036
    %v1334 = vpop.f32.mrf.mxu0
    %v1335 = vadd.f32 %v1246, %v1334
    %v1336 = vpop.f32.mrf.mxu0
    %v1337 = vadd.f32 %v1248, %v1336
    %1338 = vmatmul.bf16.gmra.mxu0 %v1038
    %v1339 = vpop.f32.mrf.mxu0
    %v1340 = vadd.f32 %v1251, %v1339
    %v1341 = vpop.f32.mrf.mxu0
    %v1342 = vadd.f32 %v1253, %v1341
    %1343 = vmatmul.bf16.gmra.mxu0 %v1040
    %v1344 = vpop.f32.mrf.mxu0
    %v1345 = vadd.f32 %v1256, %v1344
    %v1346 = vpop.f32.mrf.mxu0
    %v1347 = vadd.f32 %v1258, %v1346
    %1348 = vmatmul.bf16.gmra.mxu0 %v1042
    %v1349 = vpop.f32.mrf.mxu0
    %v1350 = vadd.f32 %v1261, %v1349
    %v1351 = vpop.f32.mrf.mxu0
    %v1352 = vadd.f32 %v1263, %v1351
    %1353 = vmatmul.bf16.gmra.mxu0 %v1044
    %v1354 = vpop.f32.mrf.mxu0
    %v1355 = vadd.f32 %v1266, %v1354
    %v1356 = vpop.f32.mrf.mxu0
    %v1357 = vadd.f32 %v1268, %v1356
    %1358 = vmatmul.bf16.gmra.mxu0 %v1046
    %v1359 = vpop.f32.mrf.mxu0
    %v1360 = vadd.f32 %v1271, %v1359
    %v1361 = vpop.f32.mrf.mxu0
    %v1362 = vadd.f32 %v1273, %v1361
    %1363 = vmatmul.bf16.gmra.mxu0 %v1048
    %v1364 = vpop.f32.mrf.mxu0
    %v1365 = vadd.f32 %v1276, %v1364
    %v1366 = vpop.f32.mrf.mxu0
    %v1367 = vadd.f32 %v1278, %v1366
    %1368 = vmatmul.bf16.gmra.mxu0 %v1050
    %v1369 = vpop.f32.mrf.mxu0
    %v1370 = vadd.f32 %v1281, %v1369
    %v1371 = vpop.f32.mrf.mxu0
    %v1372 = vadd.f32 %v1283, %v1371
    %1373 = vmatmul.bf16.gmra.mxu0 %v1052
    %v1374 = vpop.f32.mrf.mxu0
    %v1375 = vadd.f32 %v1286, %v1374
    %v1376 = vpop.f32.mrf.mxu0
    %v1377 = vadd.f32 %v1288, %v1376
    %1378 = vmatmul.bf16.gmra.mxu0 %v1054
    %v1379 = vpop.f32.mrf.mxu0
    %v1380 = vadd.f32 %v1291, %v1379
    %v1381 = vpop.f32.mrf.mxu0
    %v1382 = vadd.f32 %v1293, %v1381
    %1383 = vmatmul.bf16.gmra.mxu0 %v1056
    %v1384 = vpop.f32.mrf.mxu0
    %v1385 = vadd.f32 %v1296, %v1384
    %v1386 = vpop.f32.mrf.mxu0
    %v1387 = vadd.f32 %v1298, %v1386
    %1388 = vmatmul.bf16.gmra.mxu0 %v1058
    %v1389 = vpop.f32.mrf.mxu0
    %v1390 = vadd.f32 %v1301, %v1389
    %v1391 = vpop.f32.mrf.mxu0
    %v1392 = vadd.f32 %v1303, %v1391
    %1393 = vmatmul.bf16.gmra.mxu0 %v1060
    %v1394 = vpop.f32.mrf.mxu0
    %v1395 = vadd.f32 %v1306, %v1394
    %v1396 = vpop.f32.mrf.mxu0
    %v1397 = vadd.f32 %v1308, %v1396
    %1398 = vdwg.mxu0
    %v1431 = vunpack.c.l.b16 %v1061
    %v1432 = vunpack.c.l.b16 %v1062
    %v1433 = vunpack.c.l.b16 %v1063
    %v1434 = vunpack.c.l.b16 %v1064
    %v1435 = vunpack.c.l.b16 %v1065
    %v1436 = vunpack.c.l.b16 %v1066
    %v1437 = vunpack.c.l.b16 %v1067
    %v1438 = vunpack.c.l.b16 %v1068
    %v1439 = vunpack.c.l.b16 %v1069
    %v1440 = vunpack.c.l.b16 %v1070
    %v1441 = vunpack.c.l.b16 %v1071
    %v1442 = vunpack.c.l.b16 %v1072
    %v1443 = vunpack.c.l.b16 %v1073
    %v1444 = vunpack.c.l.b16 %v1074
    %v1445 = vunpack.c.l.b16 %v1075
    %v1446 = vunpack.c.l.b16 %v1076
    %v1447 = vunpack.c.l.b16 %v1077
    %v1448 = vunpack.c.l.b16 %v1078
    %v1449 = vunpack.c.l.b16 %v1079
    %v1450 = vunpack.c.l.b16 %v1080
    %v1451 = vunpack.c.l.b16 %v1081
    %v1452 = vunpack.c.l.b16 %v1082
    %v1453 = vunpack.c.l.b16 %v1083
    %v1454 = vunpack.c.l.b16 %v1084
    %v1455 = vunpack.c.l.b16 %v1085
    %v1456 = vunpack.c.l.b16 %v1086
    %v1457 = vunpack.c.l.b16 %v1087
    %v1458 = vunpack.c.l.b16 %v1088
    %v1459 = vunpack.c.l.b16 %v1089
    %v1460 = vunpack.c.l.b16 %v1090
    %v1461 = vunpack.c.l.b16 %v1091
    %v1462 = vunpack.c.l.b16 %v1092
    %v1463 = vpack.c.b16 %v1432, %v1431
    %v1464 = vpack.c.b16 %v1434, %v1433
    %v1465 = vpack.c.b16 %v1436, %v1435
    %v1466 = vpack.c.b16 %v1438, %v1437
    %v1467 = vpack.c.b16 %v1440, %v1439
    %v1468 = vpack.c.b16 %v1442, %v1441
    %v1469 = vpack.c.b16 %v1444, %v1443
    %v1470 = vpack.c.b16 %v1446, %v1445
    %v1471 = vpack.c.b16 %v1448, %v1447
    %v1472 = vpack.c.b16 %v1450, %v1449
    %v1473 = vpack.c.b16 %v1452, %v1451
    %v1474 = vpack.c.b16 %v1454, %v1453
    %v1475 = vpack.c.b16 %v1456, %v1455
    %v1476 = vpack.c.b16 %v1458, %v1457
    %v1477 = vpack.c.b16 %v1460, %v1459
    %v1478 = vpack.c.b16 %v1462, %v1461
    %1495 = vmatpush.bf16.msra.mxu0 %v1470
    %1496 = vmatpush.bf16.msra.mxu0 %v1469
    %1497 = vmatpush.bf16.msra.mxu0 %v1468
    %1498 = vmatpush.bf16.msra.mxu0 %v1467
    %1499 = vmatpush.bf16.msra.mxu0 %v1466
    %1500 = vmatpush.bf16.msra.mxu0 %v1465
    %1501 = vmatpush.bf16.msra.mxu0 %v1464
    %1502 = vmatpush.bf16.msra.mxu0 %v1463
    %1503 = vmatmul.bf16.gmra.mxu0 %v1029
    %v1504 = vpop.f32.mrf.mxu0
    %v1505 = vadd.f32 %v1320, %v1504
    %v1506 = vpop.f32.mrf.mxu0
    %v1507 = vadd.f32 %v1322, %v1506
    %1508 = vmatmul.bf16.gmra.mxu0 %v1031
    %v1509 = vpop.f32.mrf.mxu0
    %v1510 = vadd.f32 %v1325, %v1509
    %v1511 = vpop.f32.mrf.mxu0
    %v1512 = vadd.f32 %v1327, %v1511
    %1513 = vmatmul.bf16.gmra.mxu0 %v1033
    %v1514 = vpop.f32.mrf.mxu0
    %v1515 = vadd.f32 %v1330, %v1514
    %v1516 = vpop.f32.mrf.mxu0
    %v1517 = vadd.f32 %v1332, %v1516
    %1518 = vmatmul.bf16.gmra.mxu0 %v1035
    %v1519 = vpop.f32.mrf.mxu0
    %v1520 = vadd.f32 %v1335, %v1519
    %v1521 = vpop.f32.mrf.mxu0
    %v1522 = vadd.f32 %v1337, %v1521
    %1523 = vmatmul.bf16.gmra.mxu0 %v1037
    %v1524 = vpop.f32.mrf.mxu0
    %v1525 = vadd.f32 %v1340, %v1524
    %v1526 = vpop.f32.mrf.mxu0
    %v1527 = vadd.f32 %v1342, %v1526
    %1528 = vmatmul.bf16.gmra.mxu0 %v1039
    %v1529 = vpop.f32.mrf.mxu0
    %v1530 = vadd.f32 %v1345, %v1529
    %v1531 = vpop.f32.mrf.mxu0
    %v1532 = vadd.f32 %v1347, %v1531
    %1533 = vmatmul.bf16.gmra.mxu0 %v1041
    %v1534 = vpop.f32.mrf.mxu0
    %v1535 = vadd.f32 %v1350, %v1534
    %v1536 = vpop.f32.mrf.mxu0
    %v1537 = vadd.f32 %v1352, %v1536
    %1538 = vmatmul.bf16.gmra.mxu0 %v1043
    %v1539 = vpop.f32.mrf.mxu0
    %v1540 = vadd.f32 %v1355, %v1539
    %v1541 = vpop.f32.mrf.mxu0
    %v1542 = vadd.f32 %v1357, %v1541
    %1543 = vmatmul.bf16.gmra.mxu0 %v1045
    %v1544 = vpop.f32.mrf.mxu0
    %v1545 = vadd.f32 %v1360, %v1544
    %v1546 = vpop.f32.mrf.mxu0
    %v1547 = vadd.f32 %v1362, %v1546
    %1548 = vmatmul.bf16.gmra.mxu0 %v1047
    %v1549 = vpop.f32.mrf.mxu0
    %v1550 = vadd.f32 %v1365, %v1549
    %v1551 = vpop.f32.mrf.mxu0
    %v1552 = vadd.f32 %v1367, %v1551
    %1553 = vmatmul.bf16.gmra.mxu0 %v1049
    %v1554 = vpop.f32.mrf.mxu0
    %v1555 = vadd.f32 %v1370, %v1554
    %v1556 = vpop.f32.mrf.mxu0
    %v1557 = vadd.f32 %v1372, %v1556
    %1558 = vmatmul.bf16.gmra.mxu0 %v1051
    %v1559 = vpop.f32.mrf.mxu0
    %v1560 = vadd.f32 %v1375, %v1559
    %v1561 = vpop.f32.mrf.mxu0
    %v1562 = vadd.f32 %v1377, %v1561
    %1563 = vmatmul.bf16.gmra.mxu0 %v1053
    %v1564 = vpop.f32.mrf.mxu0
    %v1565 = vadd.f32 %v1380, %v1564
    %v1566 = vpop.f32.mrf.mxu0
    %v1567 = vadd.f32 %v1382, %v1566
    %1568 = vmatmul.bf16.gmra.mxu0 %v1055
    %v1569 = vpop.f32.mrf.mxu0
    %v1570 = vadd.f32 %v1385, %v1569
    %v1571 = vpop.f32.mrf.mxu0
    %v1572 = vadd.f32 %v1387, %v1571
    %1573 = vmatmul.bf16.gmra.mxu0 %v1057
    %v1574 = vpop.f32.mrf.mxu0
    %v1575 = vadd.f32 %v1390, %v1574
    %v1576 = vpop.f32.mrf.mxu0
    %v1577 = vadd.f32 %v1392, %v1576
    %1578 = vmatmul.bf16.gmra.mxu0 %v1059
    %v1579 = vpop.f32.mrf.mxu0
    %v1580 = vadd.f32 %v1395, %v1579
    %v1581 = vpop.f32.mrf.mxu0
    %v1582 = vadd.f32 %v1397, %v1581
    %1583 = vdwg.mxu0
    %1584 = vmatpush.bf16.msra.mxu0 %v1478
    %1585 = vmatpush.bf16.msra.mxu0 %v1477
    %1586 = vmatpush.bf16.msra.mxu0 %v1476
    %1587 = vmatpush.bf16.msra.mxu0 %v1475
    %1588 = vmatpush.bf16.msra.mxu0 %v1474
    %1589 = vmatpush.bf16.msra.mxu0 %v1473
    %1590 = vmatpush.bf16.msra.mxu0 %v1472
    %1591 = vmatpush.bf16.msra.mxu0 %v1471
    %1592 = vmatmul.bf16.gmra.mxu0 %v1030
    %v1593 = vpop.f32.mrf.mxu0
    %v1594 = vadd.f32 %v1505, %v1593
    %v1595 = vpop.f32.mrf.mxu0
    %v1596 = vadd.f32 %v1507, %v1595
    %1597 = vmatmul.bf16.gmra.mxu0 %v1032
    %v1598 = vpop.f32.mrf.mxu0
    %v1599 = vadd.f32 %v1510, %v1598
    %v1600 = vpop.f32.mrf.mxu0
    %v1601 = vadd.f32 %v1512, %v1600
    %1602 = vmatmul.bf16.gmra.mxu0 %v1034
    %v1603 = vpop.f32.mrf.mxu0
    %v1604 = vadd.f32 %v1515, %v1603
    %v1605 = vpop.f32.mrf.mxu0
    %v1606 = vadd.f32 %v1517, %v1605
    %1607 = vmatmul.bf16.gmra.mxu0 %v1036
    %v1608 = vpop.f32.mrf.mxu0
    %v1609 = vadd.f32 %v1520, %v1608
    %v1610 = vpop.f32.mrf.mxu0
    %v1611 = vadd.f32 %v1522, %v1610
    %1612 = vmatmul.bf16.gmra.mxu0 %v1038
    %v1613 = vpop.f32.mrf.mxu0
    %v1614 = vadd.f32 %v1525, %v1613
    %v1615 = vpop.f32.mrf.mxu0
    %v1616 = vadd.f32 %v1527, %v1615
    %1617 = vmatmul.bf16.gmra.mxu0 %v1040
    %v1618 = vpop.f32.mrf.mxu0
    %v1619 = vadd.f32 %v1530, %v1618
    %v1620 = vpop.f32.mrf.mxu0
    %v1621 = vadd.f32 %v1532, %v1620
    %1622 = vmatmul.bf16.gmra.mxu0 %v1042
    %v1623 = vpop.f32.mrf.mxu0
    %v1624 = vadd.f32 %v1535, %v1623
    %v1625 = vpop.f32.mrf.mxu0
    %v1626 = vadd.f32 %v1537, %v1625
    %1627 = vmatmul.bf16.gmra.mxu0 %v1044
    %v1628 = vpop.f32.mrf.mxu0
    %v1629 = vadd.f32 %v1540, %v1628
    %v1630 = vpop.f32.mrf.mxu0
    %v1631 = vadd.f32 %v1542, %v1630
    %1632 = vmatmul.bf16.gmra.mxu0 %v1046
    %v1633 = vpop.f32.mrf.mxu0
    %v1634 = vadd.f32 %v1545, %v1633
    %v1635 = vpop.f32.mrf.mxu0
    %v1636 = vadd.f32 %v1547, %v1635
    %1637 = vmatmul.bf16.gmra.mxu0 %v1048
    %v1638 = vpop.f32.mrf.mxu0
    %v1639 = vadd.f32 %v1550, %v1638
    %v1640 = vpop.f32.mrf.mxu0
    %v1641 = vadd.f32 %v1552, %v1640
    %1642 = vmatmul.bf16.gmra.mxu0 %v1050
    %v1643 = vpop.f32.mrf.mxu0
    %v1644 = vadd.f32 %v1555, %v1643
    %v1645 = vpop.f32.mrf.mxu0
    %v1646 = vadd.f32 %v1557, %v1645
    %1647 = vmatmul.bf16.gmra.mxu0 %v1052
    %v1648 = vpop.f32.mrf.mxu0
    %v1649 = vadd.f32 %v1560, %v1648
    %v1650 = vpop.f32.mrf.mxu0
    %v1651 = vadd.f32 %v1562, %v1650
    %1652 = vmatmul.bf16.gmra.mxu0 %v1054
    %v1653 = vpop.f32.mrf.mxu0
    %v1654 = vadd.f32 %v1565, %v1653
    %v1655 = vpop.f32.mrf.mxu0
    %v1656 = vadd.f32 %v1567, %v1655
    %1657 = vmatmul.bf16.gmra.mxu0 %v1056
    %v1658 = vpop.f32.mrf.mxu0
    %v1659 = vadd.f32 %v1570, %v1658
    %v1660 = vpop.f32.mrf.mxu0
    %v1661 = vadd.f32 %v1572, %v1660
    %1662 = vmatmul.bf16.gmra.mxu0 %v1058
    %v1663 = vpop.f32.mrf.mxu0
    %v1664 = vadd.f32 %v1575, %v1663
    %v1665 = vpop.f32.mrf.mxu0
    %v1666 = vadd.f32 %v1577, %v1665
    %1667 = vmatmul.bf16.gmra.mxu0 %v1060
    %v1668 = vpop.f32.mrf.mxu0
    %v1669 = vadd.f32 %v1580, %v1668
    %v1670 = vpop.f32.mrf.mxu0
    %v1671 = vadd.f32 %v1582, %v1670
    %1672 = vdwg.mxu0
    %v1673 = vld [vmem:[#allocation2] sm:$0xf]
    %v1674 = vld [vmem:[#allocation2 + $0x4] sm:$0xf]
    %v1675 = vld [vmem:[#allocation2 + $0x8] sm:$0xf]
    %v1676 = vld [vmem:[#allocation2 + $0xc] sm:$0xf]
    %v1677 = vld [vmem:[#allocation2 + $0x10] sm:$0xf]
    %v1678 = vld [vmem:[#allocation2 + $0x14] sm:$0xf]
    %v1679 = vld [vmem:[#allocation2 + $0x18] sm:$0xf]
    %v1680 = vld [vmem:[#allocation2 + $0x1c] sm:$0xf]
    %v1681 = vld [vmem:[#allocation2 + $0x20] sm:$0xf]
    %v1682 = vld [vmem:[#allocation2 + $0x24] sm:$0xf]
    %v1683 = vld [vmem:[#allocation2 + $0x28] sm:$0xf]
    %v1684 = vld [vmem:[#allocation2 + $0x2c] sm:$0xf]
    %v1685 = vld [vmem:[#allocation2 + $0x30] sm:$0xf]
    %v1686 = vld [vmem:[#allocation2 + $0x34] sm:$0xf]
    %v1687 = vld [vmem:[#allocation2 + $0x38] sm:$0xf]
    %v1688 = vld [vmem:[#allocation2 + $0x3c] sm:$0xf]
    %v1689 = vld [vmem:[#allocation2 + $0x40] sm:$0xf]
    %v1690 = vld [vmem:[#allocation2 + $0x44] sm:$0xf]
    %v1691 = vld [vmem:[#allocation2 + $0x48] sm:$0xf]
    %v1692 = vld [vmem:[#allocation2 + $0x4c] sm:$0xf]
    %v1693 = vld [vmem:[#allocation2 + $0x50] sm:$0xf]
    %v1694 = vld [vmem:[#allocation2 + $0x54] sm:$0xf]
    %v1695 = vld [vmem:[#allocation2 + $0x58] sm:$0xf]
    %v1696 = vld [vmem:[#allocation2 + $0x5c] sm:$0xf]
    %v1697 = vld [vmem:[#allocation2 + $0x60] sm:$0xf]
    %v1698 = vld [vmem:[#allocation2 + $0x64] sm:$0xf]
    %v1699 = vld [vmem:[#allocation2 + $0x68] sm:$0xf]
    %v1700 = vld [vmem:[#allocation2 + $0x6c] sm:$0xf]
    %v1701 = vld [vmem:[#allocation2 + $0x70] sm:$0xf]
    %v1702 = vld [vmem:[#allocation2 + $0x74] sm:$0xf]
    %v1703 = vld [vmem:[#allocation2 + $0x78] sm:$0xf]
    %v1704 = vld [vmem:[#allocation2 + $0x7c] sm:$0xf]
    %v1737 = vunpack.c.l.b16 %v1673
    %v1738 = vunpack.c.l.b16 %v1674
    %v1739 = vunpack.c.l.b16 %v1675
    %v1740 = vunpack.c.l.b16 %v1676
    %v1741 = vunpack.c.l.b16 %v1677
    %v1742 = vunpack.c.l.b16 %v1678
    %v1743 = vunpack.c.l.b16 %v1679
    %v1744 = vunpack.c.l.b16 %v1680
    %v1745 = vunpack.c.l.b16 %v1681
    %v1746 = vunpack.c.l.b16 %v1682
    %v1747 = vunpack.c.l.b16 %v1683
    %v1748 = vunpack.c.l.b16 %v1684
    %v1749 = vunpack.c.l.b16 %v1685
    %v1750 = vunpack.c.l.b16 %v1686
    %v1751 = vunpack.c.l.b16 %v1687
    %v1752 = vunpack.c.l.b16 %v1688
    %v1753 = vunpack.c.l.b16 %v1689
    %v1754 = vunpack.c.l.b16 %v1690
    %v1755 = vunpack.c.l.b16 %v1691
    %v1756 = vunpack.c.l.b16 %v1692
    %v1757 = vunpack.c.l.b16 %v1693
    %v1758 = vunpack.c.l.b16 %v1694
    %v1759 = vunpack.c.l.b16 %v1695
    %v1760 = vunpack.c.l.b16 %v1696
    %v1761 = vunpack.c.l.b16 %v1697
    %v1762 = vunpack.c.l.b16 %v1698
    %v1763 = vunpack.c.l.b16 %v1699
    %v1764 = vunpack.c.l.b16 %v1700
    %v1765 = vunpack.c.l.b16 %v1701
    %v1766 = vunpack.c.l.b16 %v1702
    %v1767 = vunpack.c.l.b16 %v1703
    %v1768 = vunpack.c.l.b16 %v1704
    %v1769 = vpack.c.b16 %v1738, %v1737
    %v1770 = vpack.c.b16 %v1740, %v1739
    %v1771 = vpack.c.b16 %v1742, %v1741
    %v1772 = vpack.c.b16 %v1744, %v1743
    %v1773 = vpack.c.b16 %v1746, %v1745
    %v1774 = vpack.c.b16 %v1748, %v1747
    %v1775 = vpack.c.b16 %v1750, %v1749
    %v1776 = vpack.c.b16 %v1752, %v1751
    %v1777 = vpack.c.b16 %v1754, %v1753
    %v1778 = vpack.c.b16 %v1756, %v1755
    %v1779 = vpack.c.b16 %v1758, %v1757
    %v1780 = vpack.c.b16 %v1760, %v1759
    %v1781 = vpack.c.b16 %v1762, %v1761
    %v1782 = vpack.c.b16 %v1764, %v1763
    %v1783 = vpack.c.b16 %v1766, %v1765
    %v1784 = vpack.c.b16 %v1768, %v1767
    %1801 = vmatpush.bf16.msra.mxu0 %v1776
    %1802 = vmatpush.bf16.msra.mxu0 %v1775
    %1803 = vmatpush.bf16.msra.mxu0 %v1774
    %1804 = vmatpush.bf16.msra.mxu0 %v1773
    %1805 = vmatpush.bf16.msra.mxu0 %v1772
    %1806 = vmatpush.bf16.msra.mxu0 %v1771
    %1807 = vmatpush.bf16.msra.mxu0 %v1770
    %1808 = vmatpush.bf16.msra.mxu0 %v1769
    %1809 = vmatmul.bf16.gmra.mxu0 %v1029
    %v1810 = vpop.f32.mrf.mxu0
    %v1811 = vadd.f32 0.0, %v1810
    %v1812 = vpop.f32.mrf.mxu0
    %v1813 = vadd.f32 0.0, %v1812
    %1814 = vmatmul.bf16.gmra.mxu0 %v1031
    %v1815 = vpop.f32.mrf.mxu0
    %v1816 = vadd.f32 0.0, %v1815
    %v1817 = vpop.f32.mrf.mxu0
    %v1818 = vadd.f32 0.0, %v1817
    %1819 = vmatmul.bf16.gmra.mxu0 %v1033
    %v1820 = vpop.f32.mrf.mxu0
    %v1821 = vadd.f32 0.0, %v1820
    %v1822 = vpop.f32.mrf.mxu0
    %v1823 = vadd.f32 0.0, %v1822
    %1824 = vmatmul.bf16.gmra.mxu0 %v1035
    %v1825 = vpop.f32.mrf.mxu0
    %v1826 = vadd.f32 0.0, %v1825
    %v1827 = vpop.f32.mrf.mxu0
    %v1828 = vadd.f32 0.0, %v1827
    %1829 = vmatmul.bf16.gmra.mxu0 %v1037
    %v1830 = vpop.f32.mrf.mxu0
    %v1831 = vadd.f32 0.0, %v1830
    %v1832 = vpop.f32.mrf.mxu0
    %v1833 = vadd.f32 0.0, %v1832
    %1834 = vmatmul.bf16.gmra.mxu0 %v1039
    %v1835 = vpop.f32.mrf.mxu0
    %v1836 = vadd.f32 0.0, %v1835
    %v1837 = vpop.f32.mrf.mxu0
    %v1838 = vadd.f32 0.0, %v1837
    %1839 = vmatmul.bf16.gmra.mxu0 %v1041
    %v1840 = vpop.f32.mrf.mxu0
    %v1841 = vadd.f32 0.0, %v1840
    %v1842 = vpop.f32.mrf.mxu0
    %v1843 = vadd.f32 0.0, %v1842
    %1844 = vmatmul.bf16.gmra.mxu0 %v1043
    %v1845 = vpop.f32.mrf.mxu0
    %v1846 = vadd.f32 0.0, %v1845
    %v1847 = vpop.f32.mrf.mxu0
    %v1848 = vadd.f32 0.0, %v1847
    %1849 = vmatmul.bf16.gmra.mxu0 %v1045
    %v1850 = vpop.f32.mrf.mxu0
    %v1851 = vadd.f32 0.0, %v1850
    %v1852 = vpop.f32.mrf.mxu0
    %v1853 = vadd.f32 0.0, %v1852
    %1854 = vmatmul.bf16.gmra.mxu0 %v1047
    %v1855 = vpop.f32.mrf.mxu0
    %v1856 = vadd.f32 0.0, %v1855
    %v1857 = vpop.f32.mrf.mxu0
    %v1858 = vadd.f32 0.0, %v1857
    %1859 = vmatmul.bf16.gmra.mxu0 %v1049
    %v1860 = vpop.f32.mrf.mxu0
    %v1861 = vadd.f32 0.0, %v1860
    %v1862 = vpop.f32.mrf.mxu0
    %v1863 = vadd.f32 0.0, %v1862
    %1864 = vmatmul.bf16.gmra.mxu0 %v1051
    %v1865 = vpop.f32.mrf.mxu0
    %v1866 = vadd.f32 0.0, %v1865
    %v1867 = vpop.f32.mrf.mxu0
    %v1868 = vadd.f32 0.0, %v1867
    %1869 = vmatmul.bf16.gmra.mxu0 %v1053
    %v1870 = vpop.f32.mrf.mxu0
    %v1871 = vadd.f32 0.0, %v1870
    %v1872 = vpop.f32.mrf.mxu0
    %v1873 = vadd.f32 0.0, %v1872
    %1874 = vmatmul.bf16.gmra.mxu0 %v1055
    %v1875 = vpop.f32.mrf.mxu0
    %v1876 = vadd.f32 0.0, %v1875
    %v1877 = vpop.f32.mrf.mxu0
    %v1878 = vadd.f32 0.0, %v1877
    %1879 = vmatmul.bf16.gmra.mxu0 %v1057
    %v1880 = vpop.f32.mrf.mxu0
    %v1881 = vadd.f32 0.0, %v1880
    %v1882 = vpop.f32.mrf.mxu0
    %v1883 = vadd.f32 0.0, %v1882
    %1884 = vmatmul.bf16.gmra.mxu0 %v1059
    %v1885 = vpop.f32.mrf.mxu0
    %v1886 = vadd.f32 0.0, %v1885
    %v1887 = vpop.f32.mrf.mxu0
    %v1888 = vadd.f32 0.0, %v1887
    %1889 = vdwg.mxu0
    %1890 = vmatpush.bf16.msra.mxu0 %v1784
    %1891 = vmatpush.bf16.msra.mxu0 %v1783
    %1892 = vmatpush.bf16.msra.mxu0 %v1782
    %1893 = vmatpush.bf16.msra.mxu0 %v1781
    %1894 = vmatpush.bf16.msra.mxu0 %v1780
    %1895 = vmatpush.bf16.msra.mxu0 %v1779
    %1896 = vmatpush.bf16.msra.mxu0 %v1778
    %1897 = vmatpush.bf16.msra.mxu0 %v1777
    %1898 = vmatmul.bf16.gmra.mxu0 %v1030
    %v1899 = vpop.f32.mrf.mxu0
    %v1900 = vadd.f32 %v1811, %v1899
    %v1901 = vpop.f32.mrf.mxu0
    %v1902 = vadd.f32 %v1813, %v1901
    %1903 = vmatmul.bf16.gmra.mxu0 %v1032
    %v1904 = vpop.f32.mrf.mxu0
    %v1905 = vadd.f32 %v1816, %v1904
    %v1906 = vpop.f32.mrf.mxu0
    %v1907 = vadd.f32 %v1818, %v1906
    %1908 = vmatmul.bf16.gmra.mxu0 %v1034
    %v1909 = vpop.f32.mrf.mxu0
    %v1910 = vadd.f32 %v1821, %v1909
    %v1911 = vpop.f32.mrf.mxu0
    %v1912 = vadd.f32 %v1823, %v1911
    %1913 = vmatmul.bf16.gmra.mxu0 %v1036
    %v1914 = vpop.f32.mrf.mxu0
    %v1915 = vadd.f32 %v1826, %v1914
    %v1916 = vpop.f32.mrf.mxu0
    %v1917 = vadd.f32 %v1828, %v1916
    %1918 = vmatmul.bf16.gmra.mxu0 %v1038
    %v1919 = vpop.f32.mrf.mxu0
    %v1920 = vadd.f32 %v1831, %v1919
    %v1921 = vpop.f32.mrf.mxu0
    %v1922 = vadd.f32 %v1833, %v1921
    %1923 = vmatmul.bf16.gmra.mxu0 %v1040
    %v1924 = vpop.f32.mrf.mxu0
    %v1925 = vadd.f32 %v1836, %v1924
    %v1926 = vpop.f32.mrf.mxu0
    %v1927 = vadd.f32 %v1838, %v1926
    %1928 = vmatmul.bf16.gmra.mxu0 %v1042
    %v1929 = vpop.f32.mrf.mxu0
    %v1930 = vadd.f32 %v1841, %v1929
    %v1931 = vpop.f32.mrf.mxu0
    %v1932 = vadd.f32 %v1843, %v1931
    %1933 = vmatmul.bf16.gmra.mxu0 %v1044
    %v1934 = vpop.f32.mrf.mxu0
    %v1935 = vadd.f32 %v1846, %v1934
    %v1936 = vpop.f32.mrf.mxu0
    %v1937 = vadd.f32 %v1848, %v1936
    %1938 = vmatmul.bf16.gmra.mxu0 %v1046
    %v1939 = vpop.f32.mrf.mxu0
    %v1940 = vadd.f32 %v1851, %v1939
    %v1941 = vpop.f32.mrf.mxu0
    %v1942 = vadd.f32 %v1853, %v1941
    %1943 = vmatmul.bf16.gmra.mxu0 %v1048
    %v1944 = vpop.f32.mrf.mxu0
    %v1945 = vadd.f32 %v1856, %v1944
    %v1946 = vpop.f32.mrf.mxu0
    %v1947 = vadd.f32 %v1858, %v1946
    %1948 = vmatmul.bf16.gmra.mxu0 %v1050
    %v1949 = vpop.f32.mrf.mxu0
    %v1950 = vadd.f32 %v1861, %v1949
    %v1951 = vpop.f32.mrf.mxu0
    %v1952 = vadd.f32 %v1863, %v1951
    %1953 = vmatmul.bf16.gmra.mxu0 %v1052
    %v1954 = vpop.f32.mrf.mxu0
    %v1955 = vadd.f32 %v1866, %v1954
    %v1956 = vpop.f32.mrf.mxu0
    %v1957 = vadd.f32 %v1868, %v1956
    %1958 = vmatmul.bf16.gmra.mxu0 %v1054
    %v1959 = vpop.f32.mrf.mxu0
    %v1960 = vadd.f32 %v1871, %v1959
    %v1961 = vpop.f32.mrf.mxu0
    %v1962 = vadd.f32 %v1873, %v1961
    %1963 = vmatmul.bf16.gmra.mxu0 %v1056
    %v1964 = vpop.f32.mrf.mxu0
    %v1965 = vadd.f32 %v1876, %v1964
    %v1966 = vpop.f32.mrf.mxu0
    %v1967 = vadd.f32 %v1878, %v1966
    %1968 = vmatmul.bf16.gmra.mxu0 %v1058
    %v1969 = vpop.f32.mrf.mxu0
    %v1970 = vadd.f32 %v1881, %v1969
    %v1971 = vpop.f32.mrf.mxu0
    %v1972 = vadd.f32 %v1883, %v1971
    %1973 = vmatmul.bf16.gmra.mxu0 %v1060
    %v1974 = vpop.f32.mrf.mxu0
    %v1975 = vadd.f32 %v1886, %v1974
    %v1976 = vpop.f32.mrf.mxu0
    %v1977 = vadd.f32 %v1888, %v1976
    %1978 = vdwg.mxu0
    %v1979 = vadd.f32 %v1594, %v1900
    %v1980 = vadd.f32 %v1596, %v1902
    %v1981 = vadd.f32 %v1599, %v1905
    %v1982 = vadd.f32 %v1601, %v1907
    %v1983 = vadd.f32 %v1604, %v1910
    %v1984 = vadd.f32 %v1606, %v1912
    %v1985 = vadd.f32 %v1609, %v1915
    %v1986 = vadd.f32 %v1611, %v1917
    %v1987 = vadd.f32 %v1614, %v1920
    %v1988 = vadd.f32 %v1616, %v1922
    %v1989 = vadd.f32 %v1619, %v1925
    %v1990 = vadd.f32 %v1621, %v1927
    %v1991 = vadd.f32 %v1624, %v1930
    %v1992 = vadd.f32 %v1626, %v1932
    %v1993 = vadd.f32 %v1629, %v1935
    %v1994 = vadd.f32 %v1631, %v1937
    %v1995 = vadd.f32 %v1634, %v1940
    %v1996 = vadd.f32 %v1636, %v1942
    %v1997 = vadd.f32 %v1639, %v1945
    %v1998 = vadd.f32 %v1641, %v1947
    %v1999 = vadd.f32 %v1644, %v1950
    %v2000 = vadd.f32 %v1646, %v1952
    %v2001 = vadd.f32 %v1649, %v1955
    %v2002 = vadd.f32 %v1651, %v1957
    %v2003 = vadd.f32 %v1654, %v1960
    %v2004 = vadd.f32 %v1656, %v1962
    %v2005 = vadd.f32 %v1659, %v1965
    %v2006 = vadd.f32 %v1661, %v1967
    %v2007 = vadd.f32 %v1664, %v1970
    %v2008 = vadd.f32 %v1666, %v1972
    %v2009 = vadd.f32 %v1669, %v1975
    %v2010 = vadd.f32 %v1671, %v1977
    %2011 = vst [vmem:[#allocation5] sm:$0xff] %v1979
    %2012 = vst [vmem:[#allocation5 + $0x8] sm:$0xff] %v1980
    %2013 = vst [vmem:[#allocation5 + $0x10] sm:$0xff] %v1981
    %2014 = vst [vmem:[#allocation5 + $0x18] sm:$0xff] %v1982
    %2015 = vst [vmem:[#allocation5 + $0x20] sm:$0xff] %v1983
    %2016 = vst [vmem:[#allocation5 + $0x28] sm:$0xff] %v1984
    %2017 = vst [vmem:[#allocation5 + $0x30] sm:$0xff] %v1985
    %2018 = vst [vmem:[#allocation5 + $0x38] sm:$0xff] %v1986
    %2019 = vst [vmem:[#allocation5 + $0x40] sm:$0xff] %v1987
    %2020 = vst [vmem:[#allocation5 + $0x48] sm:$0xff] %v1988
    %2021 = vst [vmem:[#allocation5 + $0x50] sm:$0xff] %v1989
    %2022 = vst [vmem:[#allocation5 + $0x58] sm:$0xff] %v1990
    %2023 = vst [vmem:[#allocation5 + $0x60] sm:$0xff] %v1991
    %2024 = vst [vmem:[#allocation5 + $0x68] sm:$0xff] %v1992
    %2025 = vst [vmem:[#allocation5 + $0x70] sm:$0xff] %v1993
    %2026 = vst [vmem:[#allocation5 + $0x78] sm:$0xff] %v1994
    %2027 = vst [vmem:[#allocation5 + $0x80] sm:$0xff] %v1995
    %2028 = vst [vmem:[#allocation5 + $0x88] sm:$0xff] %v1996
    %2029 = vst [vmem:[#allocation5 + $0x90] sm:$0xff] %v1997
    %2030 = vst [vmem:[#allocation5 + $0x98] sm:$0xff] %v1998
    %2031 = vst [vmem:[#allocation5 + $0xa0] sm:$0xff] %v1999
    %2032 = vst [vmem:[#allocation5 + $0xa8] sm:$0xff] %v2000
    %2033 = vst [vmem:[#allocation5 + $0xb0] sm:$0xff] %v2001
    %2034 = vst [vmem:[#allocation5 + $0xb8] sm:$0xff] %v2002
    %2035 = vst [vmem:[#allocation5 + $0xc0] sm:$0xff] %v2003
    %2036 = vst [vmem:[#allocation5 + $0xc8] sm:$0xff] %v2004
    %2037 = vst [vmem:[#allocation5 + $0xd0] sm:$0xff] %v2005
    %2038 = vst [vmem:[#allocation5 + $0xd8] sm:$0xff] %v2006
    %2039 = vst [vmem:[#allocation5 + $0xe0] sm:$0xff] %v2007
    %2040 = vst [vmem:[#allocation5 + $0xe8] sm:$0xff] %v2008
    %2041 = vst [vmem:[#allocation5 + $0xf0] sm:$0xff] %v2009
    %2042 = vst [vmem:[#allocation5 + $0xf8] sm:$0xff] %v2010
    // Predicated region
    $region22: #{tpu_custom_call.1} parent=1 // pred_check
      _
    $region23: #{tpu_custom_call.1} parent=1 // pred_check_branch
      %2044 = sbr.rel (0) target = $region25
    $region24: #{tpu_custom_call.1} parent=1 // pred_region
      %2046 = vsyncadd [#allocation4], 0
      %s2047 = sshll.u32 [#allocation5], 4
      %s2048 = int_to_ptr.vmem [resolvable:$true] %s2047
      %s2049 = sshll.u32 %s4, 4
      %s2050 = int_to_ptr.hbm [resolvable:$true] %s2049
      %2055 = dma.vmem_to_hbm [thread:$0]  %s2048, 4096, %s2050, [#allocation4], 128, 128, 8
    $region25: #{tpu_custom_call.1} parent=1 // pred_fallthru
      _
    // Predicated region
    $region26: #{tpu_custom_call.1} parent=1 // pred_check
      _
    $region27: #{tpu_custom_call.1} parent=1 // pred_check_branch
      %2057 = sbr.rel (0) target = $region29
    $region28: #{tpu_custom_call.1} parent=1 // pred_region
      %2059 = dma.done [#allocation4], 4096
    $region29: #{tpu_custom_call.1} parent=1 // pred_fallthru
      _
    %2060 = vsyncpa [#allocation3], 1
    %2061 = vsyncpa [#allocation4], 1

</llo_original>
